<compile_context>
chip_gen: v7x
topology: tpu7x:2x2x1
jax: 0.10.0
libtpu: 0.0.40
codegen_flags: <defaults>
</compile_context>

<pallas_src>
import numpy as np

import jax
import jax.numpy as jnp
from jax.experimental import pallas as pl
from jax.experimental.pallas import tpu as pltpu

_HIDDEN = 10          # fc1 output features
_IN = 2               # fc1 input features
_LANES = 128          # samples per packed row
_PAIR = 2 * _LANES    # 256 interleaved (f0, f1) lanes per packed row

# Deinterleave permutation: columns [0,128) pick even lanes (feature 0),
# columns [128,256) pick odd lanes (feature 1).  Pure 0/1 matrix -> exact.
_E_DEINT = np.zeros((_PAIR, _PAIR), np.float32)
_E_DEINT[2 * np.arange(_LANES), np.arange(_LANES)] = 1.0
_E_DEINT[2 * np.arange(_LANES) + 1, _LANES + np.arange(_LANES)] = 1.0


def _cdiv(a, b):
    return -(-a // b)


def _round_up(a, b):
    return _cdiv(a, b) * b


def _vmem_budget_bytes():
    """Per-generation VMEM budget (~half of physical): 32 MiB on v7x,
    64 MiB on v5e/v6e.  Passed as vmem_limit_bytes so the enlarged tiles
    compile everywhere (v5e's default scoped limit is only 16 MiB)."""
    try:
        cap = int(pltpu.get_tpu_info().vmem_capacity_bytes)
    except Exception:
        cap = 64 * 1024 * 1024
    budget = min(cap // 2, 64 * 1024 * 1024)
    return max(budget, 16 * 1024 * 1024)


def _choose_tiling(rows, sub, budget_bytes):
    """Pick (tile_rows, grid_n).  ~16 KiB of VMEM per packed row is assumed
    (double-buffered in/out blocks + elementwise temporaries), giving
    2048-row tiles (256K samples, ~3 MiB HBM traffic/step) under a 32 MiB
    budget (v7x) and 4096-row tiles under 64 MiB (v5e/v6e)."""
    per_row = 16 * 1024
    cap_rows = max(sub, (budget_bytes // per_row) // sub * sub)
    grid_n = max(1, _cdiv(rows, cap_rows))
    # Prefer >= 2 grid steps on large inputs so the "parallel" axis actually
    # splits across both TensorCores on v7x (harmless on v5e/v6e).
    if grid_n == 1 and rows >= 16 * sub:
        grid_n = 2
    tile_rows = _round_up(_cdiv(rows, grid_n), sub)
    grid_n = _cdiv(rows, tile_rows)
    return tile_rows, grid_n


def _mlp_kernel(params_ref, e_ref, x_ref, o_ref):
    """One batch tile: (tile_rows, 256) interleaved pairs -> (tile_rows, 128).

    params_ref : SMEM (41,) f32  [0:10]=w1[0,:], [10:20]=w1[1,:],
                 [20:30]=b1, [30:40]=w2[:,0], [40]=b2
    e_ref      : VMEM (256, 256) deinterleave permutation (constant index_map
                 -> VMEM-resident across grid steps)
    x_ref      : VMEM (tile_rows, 256) row-major interleaved samples
    o_ref      : VMEM (tile_rows, 128) one output per sample (lane-dense)
    """
    # In-kernel deinterleave on the (otherwise idle) MXU.
    xd = jax.lax.dot_general(
        x_ref[...], e_ref[...],
        dimension_numbers=(((1,), (0,)), ((), ())),
        preferred_element_type=jnp.float32,
        precision=jax.lax.Precision.HIGHEST)
    x0 = xd[:, :_LANES]     # feature 0, one sample per lane
    x1 = xd[:, _LANES:]     # feature 1

    # fc1 + tanh + fc2: static unroll over the 10 hidden units with scalar
    # weights from SMEM -> exactly 10 tanh/sample on fully populated vregs.
    acc = jnp.zeros_like(x0)
    for h in range(_HIDDEN):
        z = (params_ref[h] * x0
             + params_ref[_HIDDEN + h] * x1
             + params_ref[2 * _HIDDEN + h])
        acc = acc + params_ref[3 * _HIDDEN + h] * jnp.tanh(z)
    o_ref[...] = (acc + params_ref[4 * _HIDDEN]).astype(o_ref.dtype)


def net_forward(x, w1, b1, w2, b2):
    """Forward pass of `Net`.  x: (N, 2); w1: (2, 10); b1: (1, 10);
    w2: (10, 1); b2: (1, 1).  Returns (N, 1) in x.dtype."""
    N = x.shape[0]
    assert x.shape == (N, _IN)
    out_dtype = x.dtype
    sub = {4: 8, 2: 16, 1: 32}.get(x.dtype.itemsize, 8)   # sublane multiple

    rows = max(1, _cdiv(N, _LANES))
    budget = _vmem_budget_bytes()
    tile_rows, grid_n = _choose_tiling(rows, sub, budget)
    rows_pad = grid_n * tile_rows
    n_pad = rows_pad * _LANES

    # Zero-copy relayout: (N, 2) -> (rows_pad, 256).  Both reshapes preserve
    # row-major contiguity (free).  jnp.pad only copies on the ragged-N path.
    x_flat = jnp.reshape(x, (-1,))
    if n_pad != N:
        x_flat = jnp.pad(x_flat, (0, _IN * (n_pad - N)))
    x2d = jnp.reshape(x_flat, (rows_pad, _PAIR))

    # All 41 weight/bias scalars, packed for SMEM.
    params = jnp.concatenate([
        jnp.reshape(w1[0, :], (_HIDDEN,)),
        jnp.reshape(w1[1, :], (_HIDDEN,)),
        jnp.reshape(b1, (_HIDDEN,)),
        jnp.reshape(w2, (_HIDDEN,)),
        jnp.reshape(b2, (1,)),
    ]).astype(jnp.float32)

    e_mat = jnp.asarray(_E_DEINT, dtype=x2d.dtype)

    y2d = pl.pallas_call(
        _mlp_kernel,
        out_shape=jax.ShapeDtypeStruct((rows_pad, _LANES), out_dtype),
        grid=(grid_n,),
        in_specs=[
            pl.BlockSpec(memory_space=pltpu.MemorySpace.SMEM),   # 41 scalars
            pl.BlockSpec((_PAIR, _PAIR), lambda i: (0, 0)),      # E (resident)
            pl.BlockSpec((tile_rows, _PAIR), lambda i: (i, 0)),  # x tile
            # NOTE: if a trace ever shows exposed DMA at step boundaries, add
            # pipeline_mode=pl.Buffered(3) on the x spec instead of shrinking
            # the tile (cheap in VMEM for this block).
        ],
        out_specs=pl.BlockSpec((tile_rows, _LANES), lambda i: (i, 0)),
        compiler_params=pltpu.CompilerParams(
            dimension_semantics=("parallel",),
            vmem_limit_bytes=int(budget),
        ),
    )(params, e_mat, x2d)

    # Free reshape back to (n_pad, 1), then drop the padded tail.
    return jnp.reshape(y2d, (n_pad, 1))[:N]


def init_params(key):
    """Deterministic init matching nn.Linear's U(-1/sqrt(fan_in), 1/sqrt(fan_in))."""
    k1, k2, k3, k4 = jax.random.split(key, 4)
    lim1 = 1.0 / jnp.sqrt(2.0)     # fc1: in_features = 2
    lim2 = 1.0 / jnp.sqrt(10.0)    # fc2: in_features = 10
    w1 = jax.random.uniform(k1, (2, _HIDDEN), jnp.float32, -lim1, lim1)   # fc1.weight^T
    b1 = jax.random.uniform(k2, (1, _HIDDEN), jnp.float32, -lim1, lim1)   # fc1.bias
    w2 = jax.random.uniform(k3, (_HIDDEN, 1), jnp.float32, -lim2, lim2)   # fc2.weight^T
    b2 = jax.random.uniform(k4, (1, 1), jnp.float32, -lim2, lim2)         # fc2.bias
    return w1, b1, w2, b2


if __name__ == "__main__":
    key = jax.random.PRNGKey(0)
    k_x, k_p = jax.random.split(key)
    w1, b1, w2, b2 = init_params(k_p)

    ok = True
    # n=8: tiny single-tile case; n=3000: ragged (pad fallback path);
    # n=16384: 128-aligned zero-copy relayout with a 2-step "parallel" grid.
    for n in (8, 3000, 16384):
        x = jax.random.normal(jax.random.fold_in(k_x, n), (n, _IN), jnp.float32)
        out = jax.block_until_ready(net_forward(x, w1, b1, w2, b2))
        ref = jnp.tanh(x @ w1 + b1) @ w2 + b2
        ok = ok and (out.shape == (n, 1))
        ok = ok and bool(jnp.allclose(out, ref, atol=1e-5, rtol=1e-5))

    assert ok
    print("KERNEL_OK")
</pallas_src>

<mosaic_0001>
module attributes {stable_mosaic.version = 11 : i64} {
  func.func @_mlp_kernel(%arg0: i32, %arg1: memref<41xf32, #tpu.memory_space<smem>>, %arg2: memref<256x256xf32, #tpu.memory_space<vmem>>, %arg3: memref<8x256xf32, #tpu.memory_space<vmem>>, %arg4: memref<8x128xf32, #tpu.memory_space<vmem>>) attributes {dimension_semantics = [#tpu.dimension_semantics<parallel>], iteration_bounds = array<i64: 1>, scalar_prefetch = 0 : i64, scratch_operands = 0 : i64, tpu.core_type = #tpu.core_type<tc>, window_params = [{transform_indices = @transform_0, window_bounds = array<i64: 41>}, {pipeline_mode = #tpu.pipeline_mode<synchronous>, transform_indices = @transform_1, window_bounds = array<i64: 256, 256>}, {transform_indices = @transform_2, window_bounds = array<i64: 8, 256>}, {transform_indices = @transform_3, window_bounds = array<i64: 8, 128>}]} {
    %c0 = arith.constant 0 : index
    %c0_0 = arith.constant 0 : index
    %0 = vector.load %arg3[%c0, %c0_0] : memref<8x256xf32, #tpu.memory_space<vmem>>, vector<8x256xf32>
    %c0_1 = arith.constant 0 : index
    %c0_2 = arith.constant 0 : index
    %1 = vector.load %arg2[%c0_1, %c0_2] : memref<256x256xf32, #tpu.memory_space<vmem>>, vector<256x256xf32>
    %cst = arith.constant dense<0.000000e+00> : vector<8x256xf32>
    %2 = tpu.matmul %0, %1, %cst {dimension_numbers = #tpu.dot_dimension_numbers<[1], [0], [0], [1], [0, 0, 1, 1], [], []>, precision = #tpu.contract_precision<fp32>} : vector<8x256xf32>, vector<256x256xf32>, vector<8x256xf32> -> vector<8x256xf32>
    %3 = vector.extract_strided_slice %2 {offsets = [0, 0], sizes = [8, 128], strides = [1, 1]} : vector<8x256xf32> to vector<8x128xf32>
    %4 = vector.extract_strided_slice %2 {offsets = [0, 128], sizes = [8, 128], strides = [1, 1]} : vector<8x256xf32> to vector<8x128xf32>
    %cst_3 = arith.constant 0.000000e+00 : f32
    %5 = vector.broadcast %cst_3 : f32 to vector<8x128xf32>
    %c0_4 = arith.constant 0 : index
    %6 = memref.load %arg1[%c0_4] : memref<41xf32, #tpu.memory_space<smem>>
    %7 = vector.broadcast %6 : f32 to vector<8x128xf32>
    %8 = arith.mulf %7, %3 : vector<8x128xf32>
    %c10 = arith.constant 10 : index
    %9 = memref.load %arg1[%c10] : memref<41xf32, #tpu.memory_space<smem>>
    %10 = vector.broadcast %9 : f32 to vector<8x128xf32>
    %11 = arith.mulf %10, %4 : vector<8x128xf32>
    %12 = arith.addf %8, %11 : vector<8x128xf32>
    %c20 = arith.constant 20 : index
    %13 = memref.load %arg1[%c20] : memref<41xf32, #tpu.memory_space<smem>>
    %14 = vector.broadcast %13 : f32 to vector<8x128xf32>
    %15 = arith.addf %12, %14 : vector<8x128xf32>
    %c30 = arith.constant 30 : index
    %16 = memref.load %arg1[%c30] : memref<41xf32, #tpu.memory_space<smem>>
    %17 = math.tanh %15 : vector<8x128xf32>
    %18 = vector.broadcast %16 : f32 to vector<8x128xf32>
    %19 = arith.mulf %18, %17 : vector<8x128xf32>
    %20 = arith.addf %5, %19 : vector<8x128xf32>
    %c1 = arith.constant 1 : index
    %21 = memref.load %arg1[%c1] : memref<41xf32, #tpu.memory_space<smem>>
    %22 = vector.broadcast %21 : f32 to vector<8x128xf32>
    %23 = arith.mulf %22, %3 : vector<8x128xf32>
    %c11 = arith.constant 11 : index
    %24 = memref.load %arg1[%c11] : memref<41xf32, #tpu.memory_space<smem>>
    %25 = vector.broadcast %24 : f32 to vector<8x128xf32>
    %26 = arith.mulf %25, %4 : vector<8x128xf32>
    %27 = arith.addf %23, %26 : vector<8x128xf32>
    %c21 = arith.constant 21 : index
    %28 = memref.load %arg1[%c21] : memref<41xf32, #tpu.memory_space<smem>>
    %29 = vector.broadcast %28 : f32 to vector<8x128xf32>
    %30 = arith.addf %27, %29 : vector<8x128xf32>
    %c31 = arith.constant 31 : index
    %31 = memref.load %arg1[%c31] : memref<41xf32, #tpu.memory_space<smem>>
    %32 = math.tanh %30 : vector<8x128xf32>
    %33 = vector.broadcast %31 : f32 to vector<8x128xf32>
    %34 = arith.mulf %33, %32 : vector<8x128xf32>
    %35 = arith.addf %20, %34 : vector<8x128xf32>
    %c2 = arith.constant 2 : index
    %36 = memref.load %arg1[%c2] : memref<41xf32, #tpu.memory_space<smem>>
    %37 = vector.broadcast %36 : f32 to vector<8x128xf32>
    %38 = arith.mulf %37, %3 : vector<8x128xf32>
    %c12 = arith.constant 12 : index
    %39 = memref.load %arg1[%c12] : memref<41xf32, #tpu.memory_space<smem>>
    %40 = vector.broadcast %39 : f32 to vector<8x128xf32>
    %41 = arith.mulf %40, %4 : vector<8x128xf32>
    %42 = arith.addf %38, %41 : vector<8x128xf32>
    %c22 = arith.constant 22 : index
    %43 = memref.load %arg1[%c22] : memref<41xf32, #tpu.memory_space<smem>>
    %44 = vector.broadcast %43 : f32 to vector<8x128xf32>
    %45 = arith.addf %42, %44 : vector<8x128xf32>
    %c32 = arith.constant 32 : index
    %46 = memref.load %arg1[%c32] : memref<41xf32, #tpu.memory_space<smem>>
    %47 = math.tanh %45 : vector<8x128xf32>
    %48 = vector.broadcast %46 : f32 to vector<8x128xf32>
    %49 = arith.mulf %48, %47 : vector<8x128xf32>
    %50 = arith.addf %35, %49 : vector<8x128xf32>
    %c3 = arith.constant 3 : index
    %51 = memref.load %arg1[%c3] : memref<41xf32, #tpu.memory_space<smem>>
    %52 = vector.broadcast %51 : f32 to vector<8x128xf32>
    %53 = arith.mulf %52, %3 : vector<8x128xf32>
    %c13 = arith.constant 13 : index
    %54 = memref.load %arg1[%c13] : memref<41xf32, #tpu.memory_space<smem>>
    %55 = vector.broadcast %54 : f32 to vector<8x128xf32>
    %56 = arith.mulf %55, %4 : vector<8x128xf32>
    %57 = arith.addf %53, %56 : vector<8x128xf32>
    %c23 = arith.constant 23 : index
    %58 = memref.load %arg1[%c23] : memref<41xf32, #tpu.memory_space<smem>>
    %59 = vector.broadcast %58 : f32 to vector<8x128xf32>
    %60 = arith.addf %57, %59 : vector<8x128xf32>
    %c33 = arith.constant 33 : index
    %61 = memref.load %arg1[%c33] : memref<41xf32, #tpu.memory_space<smem>>
    %62 = math.tanh %60 : vector<8x128xf32>
    %63 = vector.broadcast %61 : f32 to vector<8x128xf32>
    %64 = arith.mulf %63, %62 : vector<8x128xf32>
    %65 = arith.addf %50, %64 : vector<8x128xf32>
    %c4 = arith.constant 4 : index
    %66 = memref.load %arg1[%c4] : memref<41xf32, #tpu.memory_space<smem>>
    %67 = vector.broadcast %66 : f32 to vector<8x128xf32>
    %68 = arith.mulf %67, %3 : vector<8x128xf32>
    %c14 = arith.constant 14 : index
    %69 = memref.load %arg1[%c14] : memref<41xf32, #tpu.memory_space<smem>>
    %70 = vector.broadcast %69 : f32 to vector<8x128xf32>
    %71 = arith.mulf %70, %4 : vector<8x128xf32>
    %72 = arith.addf %68, %71 : vector<8x128xf32>
    %c24 = arith.constant 24 : index
    %73 = memref.load %arg1[%c24] : memref<41xf32, #tpu.memory_space<smem>>
    %74 = vector.broadcast %73 : f32 to vector<8x128xf32>
    %75 = arith.addf %72, %74 : vector<8x128xf32>
    %c34 = arith.constant 34 : index
    %76 = memref.load %arg1[%c34] : memref<41xf32, #tpu.memory_space<smem>>
    %77 = math.tanh %75 : vector<8x128xf32>
    %78 = vector.broadcast %76 : f32 to vector<8x128xf32>
    %79 = arith.mulf %78, %77 : vector<8x128xf32>
    %80 = arith.addf %65, %79 : vector<8x128xf32>
    %c5 = arith.constant 5 : index
    %81 = memref.load %arg1[%c5] : memref<41xf32, #tpu.memory_space<smem>>
    %82 = vector.broadcast %81 : f32 to vector<8x128xf32>
    %83 = arith.mulf %82, %3 : vector<8x128xf32>
    %c15 = arith.constant 15 : index
    %84 = memref.load %arg1[%c15] : memref<41xf32, #tpu.memory_space<smem>>
    %85 = vector.broadcast %84 : f32 to vector<8x128xf32>
    %86 = arith.mulf %85, %4 : vector<8x128xf32>
    %87 = arith.addf %83, %86 : vector<8x128xf32>
    %c25 = arith.constant 25 : index
    %88 = memref.load %arg1[%c25] : memref<41xf32, #tpu.memory_space<smem>>
    %89 = vector.broadcast %88 : f32 to vector<8x128xf32>
    %90 = arith.addf %87, %89 : vector<8x128xf32>
    %c35 = arith.constant 35 : index
    %91 = memref.load %arg1[%c35] : memref<41xf32, #tpu.memory_space<smem>>
    %92 = math.tanh %90 : vector<8x128xf32>
    %93 = vector.broadcast %91 : f32 to vector<8x128xf32>
    %94 = arith.mulf %93, %92 : vector<8x128xf32>
    %95 = arith.addf %80, %94 : vector<8x128xf32>
    %c6 = arith.constant 6 : index
    %96 = memref.load %arg1[%c6] : memref<41xf32, #tpu.memory_space<smem>>
    %97 = vector.broadcast %96 : f32 to vector<8x128xf32>
    %98 = arith.mulf %97, %3 : vector<8x128xf32>
    %c16 = arith.constant 16 : index
    %99 = memref.load %arg1[%c16] : memref<41xf32, #tpu.memory_space<smem>>
    %100 = vector.broadcast %99 : f32 to vector<8x128xf32>
    %101 = arith.mulf %100, %4 : vector<8x128xf32>
    %102 = arith.addf %98, %101 : vector<8x128xf32>
    %c26 = arith.constant 26 : index
    %103 = memref.load %arg1[%c26] : memref<41xf32, #tpu.memory_space<smem>>
    %104 = vector.broadcast %103 : f32 to vector<8x128xf32>
    %105 = arith.addf %102, %104 : vector<8x128xf32>
    %c36 = arith.constant 36 : index
    %106 = memref.load %arg1[%c36] : memref<41xf32, #tpu.memory_space<smem>>
    %107 = math.tanh %105 : vector<8x128xf32>
    %108 = vector.broadcast %106 : f32 to vector<8x128xf32>
    %109 = arith.mulf %108, %107 : vector<8x128xf32>
    %110 = arith.addf %95, %109 : vector<8x128xf32>
    %c7 = arith.constant 7 : index
    %111 = memref.load %arg1[%c7] : memref<41xf32, #tpu.memory_space<smem>>
    %112 = vector.broadcast %111 : f32 to vector<8x128xf32>
    %113 = arith.mulf %112, %3 : vector<8x128xf32>
    %c17 = arith.constant 17 : index
    %114 = memref.load %arg1[%c17] : memref<41xf32, #tpu.memory_space<smem>>
    %115 = vector.broadcast %114 : f32 to vector<8x128xf32>
    %116 = arith.mulf %115, %4 : vector<8x128xf32>
    %117 = arith.addf %113, %116 : vector<8x128xf32>
    %c27 = arith.constant 27 : index
    %118 = memref.load %arg1[%c27] : memref<41xf32, #tpu.memory_space<smem>>
    %119 = vector.broadcast %118 : f32 to vector<8x128xf32>
    %120 = arith.addf %117, %119 : vector<8x128xf32>
    %c37 = arith.constant 37 : index
    %121 = memref.load %arg1[%c37] : memref<41xf32, #tpu.memory_space<smem>>
    %122 = math.tanh %120 : vector<8x128xf32>
    %123 = vector.broadcast %121 : f32 to vector<8x128xf32>
    %124 = arith.mulf %123, %122 : vector<8x128xf32>
    %125 = arith.addf %110, %124 : vector<8x128xf32>
    %c8 = arith.constant 8 : index
    %126 = memref.load %arg1[%c8] : memref<41xf32, #tpu.memory_space<smem>>
    %127 = vector.broadcast %126 : f32 to vector<8x128xf32>
    %128 = arith.mulf %127, %3 : vector<8x128xf32>
    %c18 = arith.constant 18 : index
    %129 = memref.load %arg1[%c18] : memref<41xf32, #tpu.memory_space<smem>>
    %130 = vector.broadcast %129 : f32 to vector<8x128xf32>
    %131 = arith.mulf %130, %4 : vector<8x128xf32>
    %132 = arith.addf %128, %131 : vector<8x128xf32>
    %c28 = arith.constant 28 : index
    %133 = memref.load %arg1[%c28] : memref<41xf32, #tpu.memory_space<smem>>
    %134 = vector.broadcast %133 : f32 to vector<8x128xf32>
    %135 = arith.addf %132, %134 : vector<8x128xf32>
    %c38 = arith.constant 38 : index
    %136 = memref.load %arg1[%c38] : memref<41xf32, #tpu.memory_space<smem>>
    %137 = math.tanh %135 : vector<8x128xf32>
    %138 = vector.broadcast %136 : f32 to vector<8x128xf32>
    %139 = arith.mulf %138, %137 : vector<8x128xf32>
    %140 = arith.addf %125, %139 : vector<8x128xf32>
    %c9 = arith.constant 9 : index
    %141 = memref.load %arg1[%c9] : memref<41xf32, #tpu.memory_space<smem>>
    %142 = vector.broadcast %141 : f32 to vector<8x128xf32>
    %143 = arith.mulf %142, %3 : vector<8x128xf32>
    %c19 = arith.constant 19 : index
    %144 = memref.load %arg1[%c19] : memref<41xf32, #tpu.memory_space<smem>>
    %145 = vector.broadcast %144 : f32 to vector<8x128xf32>
    %146 = arith.mulf %145, %4 : vector<8x128xf32>
    %147 = arith.addf %143, %146 : vector<8x128xf32>
    %c29 = arith.constant 29 : index
    %148 = memref.load %arg1[%c29] : memref<41xf32, #tpu.memory_space<smem>>
    %149 = vector.broadcast %148 : f32 to vector<8x128xf32>
    %150 = arith.addf %147, %149 : vector<8x128xf32>
    %c39 = arith.constant 39 : index
    %151 = memref.load %arg1[%c39] : memref<41xf32, #tpu.memory_space<smem>>
    %152 = math.tanh %150 : vector<8x128xf32>
    %153 = vector.broadcast %151 : f32 to vector<8x128xf32>
    %154 = arith.mulf %153, %152 : vector<8x128xf32>
    %155 = arith.addf %140, %154 : vector<8x128xf32>
    %c40 = arith.constant 40 : index
    %156 = memref.load %arg1[%c40] : memref<41xf32, #tpu.memory_space<smem>>
    %157 = vector.broadcast %156 : f32 to vector<8x128xf32>
    %158 = arith.addf %155, %157 : vector<8x128xf32>
    %c0_5 = arith.constant 0 : index
    %c0_6 = arith.constant 0 : index
    %159 = vector.load %arg4[%c0_5, %c0_6] : memref<8x128xf32, #tpu.memory_space<vmem>>, vector<8x128xf32>
    tpu.vector_store %arg4[%c0_5, %c0_6], %158 {strides = array<i32>} : memref<8x128xf32, #tpu.memory_space<vmem>>, vector<8x128xf32>,
    return
  }
  func.func @transform_0(%arg0: i32) -> i32 {
    %c0_i32 = arith.constant 0 : i32
    %c0_i32_0 = arith.constant 0 : i32
    return %c0_i32 : i32
  }
  func.func @transform_1(%arg0: i32) -> (i32, i32) {
    %c0_i32 = arith.constant 0 : i32
    %c0_i32_0 = arith.constant 0 : i32
    %c0_i32_1 = arith.constant 0 : i32
    return %c0_i32, %c0_i32_0 : i32, i32
  }
  func.func @transform_2(%arg0: i32) -> (i32, i32) {
    %c0_i32 = arith.constant 0 : i32
    %c0_i32_0 = arith.constant 0 : i32
    return %arg0, %c0_i32 : i32, i32
  }
  func.func @transform_3(%arg0: i32) -> (i32, i32) {
    %c0_i32 = arith.constant 0 : i32
    %c0_i32_0 = arith.constant 0 : i32
    return %arg0, %c0_i32 : i32, i32
  }
}

</mosaic_0001>

<llo_original>
// kernel: tpu_custom_call.1
$region0: #{tpu_custom_call.1}
  #allocation0 [shape = 'u32[]', space=smem, size = 0x4, offset = 0x4, fixed_abs, tag = 'smem constant byte address 0x4 - core index']
  #allocation1 [shape = 'u32[144,128]{1,0:T(1,128)}', space=vmem, size = 0x12000, scoped, tag = 'internal scratch']
  %s0 = inlined_call_operand.hbm [shape: f32[41], index: 0, kind: input, shape index: {}]
  %s1 = inlined_call_operand.hbm [shape: f32[256,256], index: 1, kind: input, shape index: {}]
  %s2 = inlined_call_operand.hbm [shape: f32[8,256], index: 2, kind: input, shape index: {}]
  %s3 = inlined_call_operand.hbm [shape: f32[8,128], index: 3, kind: output, shape index: {}]
  %s4 = sld [smem:[#allocation0]]
  $region34: #{tpu_custom_call.1} parent=0
    _
  %s6 = ssub.s32 1, %s4
  %s7 = scalar_select 0, %s6, %s4
  $region1: #{tpu_custom_call.1} parent=0
    #allocation2 [shape = 'u8[512]{0}', space=smem, size = 0x200, scoped, tag = 'input window, operand 0, single buffered']
    #allocation3 [shape = 's32[1]{0}', space=sflag, size = 0x4, scoped, tag = 'scoped memory for tpu_custom_call.1']
    #allocation4 [shape = 's32[1]{0}', space=sflag, size = 0x4, scoped, tag = 'scoped memory for tpu_custom_call.1']
    #allocation5 [shape = 's32[1]{0}', space=sflag, size = 0x4, scoped, tag = 'scoped memory for tpu_custom_call.1']
    #allocation6 [shape = 'u8[262144]{0}', space=vmem, size = 0x40000, scoped, tag = 'input window, operand 1, single buffered']
    #allocation7 [shape = 'u8[8192]{0}', space=vmem, size = 0x2000, scoped, tag = 'input window, operand 2, single buffered']
    #allocation8 [shape = 's32[1]{0}', space=sflag, size = 0x4, scoped, tag = 'scoped memory for tpu_custom_call.1']
    #allocation9 [shape = 'u8[4096]{0}', space=vmem, size = 0x1000, scoped, tag = 'output window, operand 0, single buffered']
    %8 = vsyncpa [#allocation5], 0
    %9 = vsyncpa [#allocation3], 0
    %10 = vsyncpa [#allocation8], 0
    %11 = vsyncpa [#allocation4], 0
    // Predicated region
    $region2: #{tpu_custom_call.1} parent=1 // pred_check
      _
    $region3: #{tpu_custom_call.1} parent=1 // pred_check_branch
      %13 = sbr.rel (0) target = $region5
    $region4: #{tpu_custom_call.1} parent=1 // pred_region
      %s15 = ssub.s32 16, 16
      %16 = vsyncadd [#allocation5], %s15
      %19 = dma.hbm_to_smem %s0, 16, [#allocation2], [#allocation5]
    $region5: #{tpu_custom_call.1} parent=1 // pred_fallthru
      _
    // Predicated region
    $region6: #{tpu_custom_call.1} parent=1 // pred_check
      _
    $region7: #{tpu_custom_call.1} parent=1 // pred_check_branch
      %21 = sbr.rel (0) target = $region9
    $region8: #{tpu_custom_call.1} parent=1 // pred_region
      %s23 = ssub.s32 8192, 8192
      %24 = vsyncadd [#allocation3], %s23
      %s25 = sshll.u32 [#allocation6], 4
      %s26 = int_to_ptr.vmem [resolvable:$true] %s25
      %31 = dma.hbm_to_vmem [thread:$0]  %s1, 8192, %s26, [#allocation3], 256, 256, 16
    $region9: #{tpu_custom_call.1} parent=1 // pred_fallthru
      _
    // Predicated region
    $region10: #{tpu_custom_call.1} parent=1 // pred_check
      _
    $region11: #{tpu_custom_call.1} parent=1 // pred_check_branch
      %33 = sbr.rel (0) target = $region13
    $region12: #{tpu_custom_call.1} parent=1 // pred_region
      %s35 = ssub.s32 256, 256
      %36 = vsyncadd [#allocation8], %s35
      %s38 = sshll.u32 [#allocation7], 4
      %s39 = int_to_ptr.vmem [resolvable:$true] %s38
      %41 = dma.hbm_to_vmem [thread:$0]  %s2, 256, %s39, [#allocation8]
    $region13: #{tpu_custom_call.1} parent=1 // pred_fallthru
      _
    // Predicated region
    $region14: #{tpu_custom_call.1} parent=1 // pred_check
      _
    $region15: #{tpu_custom_call.1} parent=1 // pred_check_branch
      %43 = sbr.rel (0) target = $region17
    $region16: #{tpu_custom_call.1} parent=1 // pred_region
      %44 = dma.done [#allocation5], 16
    $region17: #{tpu_custom_call.1} parent=1 // pred_fallthru
      _
    // Predicated region
    $region18: #{tpu_custom_call.1} parent=1 // pred_check
      _
    $region19: #{tpu_custom_call.1} parent=1 // pred_check_branch
      %46 = sbr.rel (0) target = $region21
    $region20: #{tpu_custom_call.1} parent=1 // pred_region
      %47 = dma.done [#allocation3], 8192
    $region21: #{tpu_custom_call.1} parent=1 // pred_fallthru
      _
    // Predicated region
    $region22: #{tpu_custom_call.1} parent=1 // pred_check
      _
    $region23: #{tpu_custom_call.1} parent=1 // pred_check_branch
      %49 = sbr.rel (0) target = $region25
    $region24: #{tpu_custom_call.1} parent=1 // pred_region
      %50 = dma.done [#allocation8], 256
    $region25: #{tpu_custom_call.1} parent=1 // pred_fallthru
      _
    %51 = sfence
    %v52 = vld [vmem:[#allocation7] sm:$0xff]
    %v53 = vld [vmem:[#allocation7 + $0x8] sm:$0xff]
    %v54 = vld [vmem:[#allocation6] sm:$0xff]
    %v55 = vld [vmem:[#allocation6 + $0x8] sm:$0xff]
    %v56 = vld [vmem:[#allocation6 + $0x10] sm:$0xff]
    %v57 = vld [vmem:[#allocation6 + $0x18] sm:$0xff]
    %v58 = vld [vmem:[#allocation6 + $0x20] sm:$0xff]
    %v59 = vld [vmem:[#allocation6 + $0x28] sm:$0xff]
    %v60 = vld [vmem:[#allocation6 + $0x30] sm:$0xff]
    %v61 = vld [vmem:[#allocation6 + $0x38] sm:$0xff]
    %v62 = vld [vmem:[#allocation6 + $0x40] sm:$0xff]
    %v63 = vld [vmem:[#allocation6 + $0x48] sm:$0xff]
    %v64 = vld [vmem:[#allocation6 + $0x50] sm:$0xff]
    %v65 = vld [vmem:[#allocation6 + $0x58] sm:$0xff]
    %v66 = vld [vmem:[#allocation6 + $0x60] sm:$0xff]
    %v67 = vld [vmem:[#allocation6 + $0x68] sm:$0xff]
    %v68 = vld [vmem:[#allocation6 + $0x70] sm:$0xff]
    %v69 = vld [vmem:[#allocation6 + $0x78] sm:$0xff]
    %v70 = vld [vmem:[#allocation6 + $0x80] sm:$0xff]
    %v71 = vld [vmem:[#allocation6 + $0x88] sm:$0xff]
    %v72 = vld [vmem:[#allocation6 + $0x90] sm:$0xff]
    %v73 = vld [vmem:[#allocation6 + $0x98] sm:$0xff]
    %v74 = vld [vmem:[#allocation6 + $0xa0] sm:$0xff]
    %v75 = vld [vmem:[#allocation6 + $0xa8] sm:$0xff]
    %v76 = vld [vmem:[#allocation6 + $0xb0] sm:$0xff]
    %v77 = vld [vmem:[#allocation6 + $0xb8] sm:$0xff]
    %v78 = vld [vmem:[#allocation6 + $0xc0] sm:$0xff]
    %v79 = vld [vmem:[#allocation6 + $0xc8] sm:$0xff]
    %v80 = vld [vmem:[#allocation6 + $0xd0] sm:$0xff]
    %v81 = vld [vmem:[#allocation6 + $0xd8] sm:$0xff]
    %v82 = vld [vmem:[#allocation6 + $0xe0] sm:$0xff]
    %v83 = vld [vmem:[#allocation6 + $0xe8] sm:$0xff]
    %v84 = vld [vmem:[#allocation6 + $0xf0] sm:$0xff]
    %v85 = vld [vmem:[#allocation6 + $0xf8] sm:$0xff]
    %v86 = vld [vmem:[#allocation6 + $0x100] sm:$0xff]
    %v87 = vld [vmem:[#allocation6 + $0x108] sm:$0xff]
    %v88 = vld [vmem:[#allocation6 + $0x110] sm:$0xff]
    %v89 = vld [vmem:[#allocation6 + $0x118] sm:$0xff]
    %v90 = vld [vmem:[#allocation6 + $0x120] sm:$0xff]
    %v91 = vld [vmem:[#allocation6 + $0x128] sm:$0xff]
    %v92 = vld [vmem:[#allocation6 + $0x130] sm:$0xff]
    %v93 = vld [vmem:[#allocation6 + $0x138] sm:$0xff]
    %v94 = vld [vmem:[#allocation6 + $0x140] sm:$0xff]
    %v95 = vld [vmem:[#allocation6 + $0x148] sm:$0xff]
    %v96 = vld [vmem:[#allocation6 + $0x150] sm:$0xff]
    %v97 = vld [vmem:[#allocation6 + $0x158] sm:$0xff]
    %v98 = vld [vmem:[#allocation6 + $0x160] sm:$0xff]
    %v99 = vld [vmem:[#allocation6 + $0x168] sm:$0xff]
    %v100 = vld [vmem:[#allocation6 + $0x170] sm:$0xff]
    %v101 = vld [vmem:[#allocation6 + $0x178] sm:$0xff]
    %v102 = vld [vmem:[#allocation6 + $0x180] sm:$0xff]
    %v103 = vld [vmem:[#allocation6 + $0x188] sm:$0xff]
    %v104 = vld [vmem:[#allocation6 + $0x190] sm:$0xff]
    %v105 = vld [vmem:[#allocation6 + $0x198] sm:$0xff]
    %v106 = vld [vmem:[#allocation6 + $0x1a0] sm:$0xff]
    %v107 = vld [vmem:[#allocation6 + $0x1a8] sm:$0xff]
    %v108 = vld [vmem:[#allocation6 + $0x1b0] sm:$0xff]
    %v109 = vld [vmem:[#allocation6 + $0x1b8] sm:$0xff]
    %v110 = vld [vmem:[#allocation6 + $0x1c0] sm:$0xff]
    %v111 = vld [vmem:[#allocation6 + $0x1c8] sm:$0xff]
    %v112 = vld [vmem:[#allocation6 + $0x1d0] sm:$0xff]
    %v113 = vld [vmem:[#allocation6 + $0x1d8] sm:$0xff]
    %v114 = vld [vmem:[#allocation6 + $0x1e0] sm:$0xff]
    %v115 = vld [vmem:[#allocation6 + $0x1e8] sm:$0xff]
    %v116 = vld [vmem:[#allocation6 + $0x1f0] sm:$0xff]
    %v117 = vld [vmem:[#allocation6 + $0x1f8] sm:$0xff]
    %v118 = vand.u32 %v55, 4294901760
    %119 = vmatprep.subr.mxu0 %v118
    %v120 = vand.u32 %v54, 4294901760
    %121 = vmatpush1.msra.mxu0 %v120
    %v122 = vand.u32 %v57, 4294901760
    %123 = vmatprep.subr.mxu0 %v122
    %v124 = vand.u32 %v56, 4294901760
    %125 = vmatpush1.msra.mxu0 %v124
    %v126 = vand.u32 %v59, 4294901760
    %127 = vmatprep.subr.mxu0 %v126
    %v128 = vand.u32 %v58, 4294901760
    %129 = vmatpush1.msra.mxu0 %v128
    %v130 = vand.u32 %v61, 4294901760
    %131 = vmatprep.subr.mxu0 %v130
    %v132 = vand.u32 %v60, 4294901760
    %133 = vmatpush1.msra.mxu0 %v132
    %v134 = vand.u32 %v63, 4294901760
    %135 = vmatprep.subr.mxu0 %v134
    %v136 = vand.u32 %v62, 4294901760
    %137 = vmatpush1.msra.mxu0 %v136
    %v138 = vand.u32 %v65, 4294901760
    %139 = vmatprep.subr.mxu0 %v138
    %v140 = vand.u32 %v64, 4294901760
    %141 = vmatpush1.msra.mxu0 %v140
    %v142 = vand.u32 %v67, 4294901760
    %143 = vmatprep.subr.mxu0 %v142
    %v144 = vand.u32 %v66, 4294901760
    %145 = vmatpush1.msra.mxu0 %v144
    %v146 = vand.u32 %v69, 4294901760
    %147 = vmatprep.subr.mxu0 %v146
    %v148 = vand.u32 %v68, 4294901760
    %149 = vmatpush1.msra.mxu0 %v148
    %v150 = vand.u32 %v71, 4294901760
    %151 = vmatprep.subr.mxu0 %v150
    %v152 = vand.u32 %v70, 4294901760
    %153 = vmatpush1.msra.mxu0 %v152
    %v154 = vand.u32 %v73, 4294901760
    %155 = vmatprep.subr.mxu0 %v154
    %v156 = vand.u32 %v72, 4294901760
    %157 = vmatpush1.msra.mxu0 %v156
    %v158 = vand.u32 %v75, 4294901760
    %159 = vmatprep.subr.mxu0 %v158
    %v160 = vand.u32 %v74, 4294901760
    %161 = vmatpush1.msra.mxu0 %v160
    %v162 = vand.u32 %v77, 4294901760
    %163 = vmatprep.subr.mxu0 %v162
    %v164 = vand.u32 %v76, 4294901760
    %165 = vmatpush1.msra.mxu0 %v164
    %v166 = vand.u32 %v79, 4294901760
    %167 = vmatprep.subr.mxu0 %v166
    %v168 = vand.u32 %v78, 4294901760
    %169 = vmatpush1.msra.mxu0 %v168
    %v170 = vand.u32 %v81, 4294901760
    %171 = vmatprep.subr.mxu0 %v170
    %v172 = vand.u32 %v80, 4294901760
    %173 = vmatpush1.msra.mxu0 %v172
    %v174 = vand.u32 %v83, 4294901760
    %175 = vmatprep.subr.mxu0 %v174
    %v176 = vand.u32 %v82, 4294901760
    %177 = vmatpush1.msra.mxu0 %v176
    %v178 = vand.u32 %v85, 4294901760
    %179 = vmatprep.subr.mxu0 %v178
    %v180 = vand.u32 %v84, 4294901760
    %181 = vmatpush1.msra.mxu0 %v180
    %v182 = vand.u32 %v87, 4294901760
    %183 = vmatprep.subr.mxu0 %v182
    %v184 = vand.u32 %v86, 4294901760
    %185 = vmatpush1.msra.mxu0 %v184
    %v186 = vand.u32 %v89, 4294901760
    %187 = vmatprep.subr.mxu0 %v186
    %v188 = vand.u32 %v88, 4294901760
    %189 = vmatpush1.msra.mxu0 %v188
    %v190 = vand.u32 %v91, 4294901760
    %191 = vmatprep.subr.mxu0 %v190
    %v192 = vand.u32 %v90, 4294901760
    %193 = vmatpush1.msra.mxu0 %v192
    %v194 = vand.u32 %v93, 4294901760
    %195 = vmatprep.subr.mxu0 %v194
    %v196 = vand.u32 %v92, 4294901760
    %197 = vmatpush1.msra.mxu0 %v196
    %v198 = vand.u32 %v95, 4294901760
    %199 = vmatprep.subr.mxu0 %v198
    %v200 = vand.u32 %v94, 4294901760
    %201 = vmatpush1.msra.mxu0 %v200
    %v202 = vand.u32 %v97, 4294901760
    %203 = vmatprep.subr.mxu0 %v202
    %v204 = vand.u32 %v96, 4294901760
    %205 = vmatpush1.msra.mxu0 %v204
    %v206 = vand.u32 %v99, 4294901760
    %207 = vmatprep.subr.mxu0 %v206
    %v208 = vand.u32 %v98, 4294901760
    %209 = vmatpush1.msra.mxu0 %v208
    %v210 = vand.u32 %v101, 4294901760
    %211 = vmatprep.subr.mxu0 %v210
    %v212 = vand.u32 %v100, 4294901760
    %213 = vmatpush1.msra.mxu0 %v212
    %v214 = vand.u32 %v103, 4294901760
    %215 = vmatprep.subr.mxu0 %v214
    %v216 = vand.u32 %v102, 4294901760
    %217 = vmatpush1.msra.mxu0 %v216
    %v218 = vand.u32 %v105, 4294901760
    %219 = vmatprep.subr.mxu0 %v218
    %v220 = vand.u32 %v104, 4294901760
    %221 = vmatpush1.msra.mxu0 %v220
    %v222 = vand.u32 %v107, 4294901760
    %223 = vmatprep.subr.mxu0 %v222
    %v224 = vand.u32 %v106, 4294901760
    %225 = vmatpush1.msra.mxu0 %v224
    %v226 = vand.u32 %v109, 4294901760
    %227 = vmatprep.subr.mxu0 %v226
    %v228 = vand.u32 %v108, 4294901760
    %229 = vmatpush1.msra.mxu0 %v228
    %v230 = vand.u32 %v111, 4294901760
    %231 = vmatprep.subr.mxu0 %v230
    %v232 = vand.u32 %v110, 4294901760
    %233 = vmatpush1.msra.mxu0 %v232
    %v234 = vand.u32 %v113, 4294901760
    %235 = vmatprep.subr.mxu0 %v234
    %v236 = vand.u32 %v112, 4294901760
    %237 = vmatpush1.msra.mxu0 %v236
    %v238 = vand.u32 %v115, 4294901760
    %239 = vmatprep.subr.mxu0 %v238
    %v240 = vand.u32 %v114, 4294901760
    %241 = vmatpush1.msra.mxu0 %v240
    %v242 = vand.u32 %v117, 4294901760
    %243 = vmatprep.subr.mxu0 %v242
    %v244 = vand.u32 %v116, 4294901760
    %245 = vmatpush1.msra.mxu0 %v244
    %v246 = vand.u32 %v53, 4294901760
    %v247 = vsub.f32 %v53, %v246
    %v248 = vand.u32 %v247, 4294901760
    %v249 = vsub.f32 %v247, %v248
    %v250 = vand.u32 %v249, 4294901760
    %251 = vmatprep.mubr.f32.mxu0 %v250
    %v252 = vand.u32 %v52, 4294901760
    %v253 = vsub.f32 %v52, %v252
    %v254 = vand.u32 %v253, 4294901760
    %v255 = vsub.f32 %v253, %v254
    %v256 = vand.u32 %v255, 4294901760
    %257 = vmatmul.mubr.f32.gmra.mrb[0].mxu0 %v256
    %v258 = vpop.f32.mrb[0].mxu0
    %v259 = vadd.f32 0.0, %v258
    %v260 = vpop.f32.mrb[0].mxu0
    %v261 = vadd.f32 0.0, %v260
    %262 = vdwg.mxu0
    %v263 = vand.u32 %v55, 4294901760
    %v264 = vsub.f32 %v55, %v263
    %v265 = vand.u32 %v264, 4294901760
    %v266 = vsub.f32 %v264, %v265
    %v267 = vand.u32 %v266, 4294901760
    %268 = vmatprep.subr.mxu0 %v267
    %v269 = vand.u32 %v54, 4294901760
    %v270 = vsub.f32 %v54, %v269
    %v271 = vand.u32 %v270, 4294901760
    %v272 = vsub.f32 %v270, %v271
    %v273 = vand.u32 %v272, 4294901760
    %274 = vmatpush1.msra.mxu0 %v273
    %v275 = vand.u32 %v57, 4294901760
    %v276 = vsub.f32 %v57, %v275
    %v277 = vand.u32 %v276, 4294901760
    %v278 = vsub.f32 %v276, %v277
    %v279 = vand.u32 %v278, 4294901760
    %280 = vmatprep.subr.mxu0 %v279
    %v281 = vand.u32 %v56, 4294901760
    %v282 = vsub.f32 %v56, %v281
    %v283 = vand.u32 %v282, 4294901760
    %v284 = vsub.f32 %v282, %v283
    %v285 = vand.u32 %v284, 4294901760
    %286 = vmatpush1.msra.mxu0 %v285
    %v287 = vand.u32 %v59, 4294901760
    %v288 = vsub.f32 %v59, %v287
    %v289 = vand.u32 %v288, 4294901760
    %v290 = vsub.f32 %v288, %v289
    %v291 = vand.u32 %v290, 4294901760
    %292 = vmatprep.subr.mxu0 %v291
    %v293 = vand.u32 %v58, 4294901760
    %v294 = vsub.f32 %v58, %v293
    %v295 = vand.u32 %v294, 4294901760
    %v296 = vsub.f32 %v294, %v295
    %v297 = vand.u32 %v296, 4294901760
    %298 = vmatpush1.msra.mxu0 %v297
    %v299 = vand.u32 %v61, 4294901760
    %v300 = vsub.f32 %v61, %v299
    %v301 = vand.u32 %v300, 4294901760
    %v302 = vsub.f32 %v300, %v301
    %v303 = vand.u32 %v302, 4294901760
    %304 = vmatprep.subr.mxu0 %v303
    %v305 = vand.u32 %v60, 4294901760
    %v306 = vsub.f32 %v60, %v305
    %v307 = vand.u32 %v306, 4294901760
    %v308 = vsub.f32 %v306, %v307
    %v309 = vand.u32 %v308, 4294901760
    %310 = vmatpush1.msra.mxu0 %v309
    %v311 = vand.u32 %v63, 4294901760
    %v312 = vsub.f32 %v63, %v311
    %v313 = vand.u32 %v312, 4294901760
    %v314 = vsub.f32 %v312, %v313
    %v315 = vand.u32 %v314, 4294901760
    %316 = vmatprep.subr.mxu0 %v315
    %v317 = vand.u32 %v62, 4294901760
    %v318 = vsub.f32 %v62, %v317
    %v319 = vand.u32 %v318, 4294901760
    %v320 = vsub.f32 %v318, %v319
    %v321 = vand.u32 %v320, 4294901760
    %322 = vmatpush1.msra.mxu0 %v321
    %v323 = vand.u32 %v65, 4294901760
    %v324 = vsub.f32 %v65, %v323
    %v325 = vand.u32 %v324, 4294901760
    %v326 = vsub.f32 %v324, %v325
    %v327 = vand.u32 %v326, 4294901760
    %328 = vmatprep.subr.mxu0 %v327
    %v329 = vand.u32 %v64, 4294901760
    %v330 = vsub.f32 %v64, %v329
    %v331 = vand.u32 %v330, 4294901760
    %v332 = vsub.f32 %v330, %v331
    %v333 = vand.u32 %v332, 4294901760
    %334 = vmatpush1.msra.mxu0 %v333
    %v335 = vand.u32 %v67, 4294901760
    %v336 = vsub.f32 %v67, %v335
    %v337 = vand.u32 %v336, 4294901760
    %v338 = vsub.f32 %v336, %v337
    %v339 = vand.u32 %v338, 4294901760
    %340 = vmatprep.subr.mxu0 %v339
    %v341 = vand.u32 %v66, 4294901760
    %v342 = vsub.f32 %v66, %v341
    %v343 = vand.u32 %v342, 4294901760
    %v344 = vsub.f32 %v342, %v343
    %v345 = vand.u32 %v344, 4294901760
    %346 = vmatpush1.msra.mxu0 %v345
    %v347 = vand.u32 %v69, 4294901760
    %v348 = vsub.f32 %v69, %v347
    %v349 = vand.u32 %v348, 4294901760
    %v350 = vsub.f32 %v348, %v349
    %v351 = vand.u32 %v350, 4294901760
    %352 = vmatprep.subr.mxu0 %v351
    %v353 = vand.u32 %v68, 4294901760
    %v354 = vsub.f32 %v68, %v353
    %v355 = vand.u32 %v354, 4294901760
    %v356 = vsub.f32 %v354, %v355
    %v357 = vand.u32 %v356, 4294901760
    %358 = vmatpush1.msra.mxu0 %v357
    %v359 = vand.u32 %v71, 4294901760
    %v360 = vsub.f32 %v71, %v359
    %v361 = vand.u32 %v360, 4294901760
    %v362 = vsub.f32 %v360, %v361
    %v363 = vand.u32 %v362, 4294901760
    %364 = vmatprep.subr.mxu0 %v363
    %v365 = vand.u32 %v70, 4294901760
    %v366 = vsub.f32 %v70, %v365
    %v367 = vand.u32 %v366, 4294901760
    %v368 = vsub.f32 %v366, %v367
    %v369 = vand.u32 %v368, 4294901760
    %370 = vmatpush1.msra.mxu0 %v369
    %v371 = vand.u32 %v73, 4294901760
    %v372 = vsub.f32 %v73, %v371
    %v373 = vand.u32 %v372, 4294901760
    %v374 = vsub.f32 %v372, %v373
    %v375 = vand.u32 %v374, 4294901760
    %376 = vmatprep.subr.mxu0 %v375
    %v377 = vand.u32 %v72, 4294901760
    %v378 = vsub.f32 %v72, %v377
    %v379 = vand.u32 %v378, 4294901760
    %v380 = vsub.f32 %v378, %v379
    %v381 = vand.u32 %v380, 4294901760
    %382 = vmatpush1.msra.mxu0 %v381
    %v383 = vand.u32 %v75, 4294901760
    %v384 = vsub.f32 %v75, %v383
    %v385 = vand.u32 %v384, 4294901760
    %v386 = vsub.f32 %v384, %v385
    %v387 = vand.u32 %v386, 4294901760
    %388 = vmatprep.subr.mxu0 %v387
    %v389 = vand.u32 %v74, 4294901760
    %v390 = vsub.f32 %v74, %v389
    %v391 = vand.u32 %v390, 4294901760
    %v392 = vsub.f32 %v390, %v391
    %v393 = vand.u32 %v392, 4294901760
    %394 = vmatpush1.msra.mxu0 %v393
    %v395 = vand.u32 %v77, 4294901760
    %v396 = vsub.f32 %v77, %v395
    %v397 = vand.u32 %v396, 4294901760
    %v398 = vsub.f32 %v396, %v397
    %v399 = vand.u32 %v398, 4294901760
    %400 = vmatprep.subr.mxu0 %v399
    %v401 = vand.u32 %v76, 4294901760
    %v402 = vsub.f32 %v76, %v401
    %v403 = vand.u32 %v402, 4294901760
    %v404 = vsub.f32 %v402, %v403
    %v405 = vand.u32 %v404, 4294901760
    %406 = vmatpush1.msra.mxu0 %v405
    %v407 = vand.u32 %v79, 4294901760
    %v408 = vsub.f32 %v79, %v407
    %v409 = vand.u32 %v408, 4294901760
    %v410 = vsub.f32 %v408, %v409
    %v411 = vand.u32 %v410, 4294901760
    %412 = vmatprep.subr.mxu0 %v411
    %v413 = vand.u32 %v78, 4294901760
    %v414 = vsub.f32 %v78, %v413
    %v415 = vand.u32 %v414, 4294901760
    %v416 = vsub.f32 %v414, %v415
    %v417 = vand.u32 %v416, 4294901760
    %418 = vmatpush1.msra.mxu0 %v417
    %v419 = vand.u32 %v81, 4294901760
    %v420 = vsub.f32 %v81, %v419
    %v421 = vand.u32 %v420, 4294901760
    %v422 = vsub.f32 %v420, %v421
    %v423 = vand.u32 %v422, 4294901760
    %424 = vmatprep.subr.mxu0 %v423
    %v425 = vand.u32 %v80, 4294901760
    %v426 = vsub.f32 %v80, %v425
    %v427 = vand.u32 %v426, 4294901760
    %v428 = vsub.f32 %v426, %v427
    %v429 = vand.u32 %v428, 4294901760
    %430 = vmatpush1.msra.mxu0 %v429
    %v431 = vand.u32 %v83, 4294901760
    %v432 = vsub.f32 %v83, %v431
    %v433 = vand.u32 %v432, 4294901760
    %v434 = vsub.f32 %v432, %v433
    %v435 = vand.u32 %v434, 4294901760
    %436 = vmatprep.subr.mxu0 %v435
    %v437 = vand.u32 %v82, 4294901760
    %v438 = vsub.f32 %v82, %v437
    %v439 = vand.u32 %v438, 4294901760
    %v440 = vsub.f32 %v438, %v439
    %v441 = vand.u32 %v440, 4294901760
    %442 = vmatpush1.msra.mxu0 %v441
    %v443 = vand.u32 %v85, 4294901760
    %v444 = vsub.f32 %v85, %v443
    %v445 = vand.u32 %v444, 4294901760
    %v446 = vsub.f32 %v444, %v445
    %v447 = vand.u32 %v446, 4294901760
    %448 = vmatprep.subr.mxu0 %v447
    %v449 = vand.u32 %v84, 4294901760
    %v450 = vsub.f32 %v84, %v449
    %v451 = vand.u32 %v450, 4294901760
    %v452 = vsub.f32 %v450, %v451
    %v453 = vand.u32 %v452, 4294901760
    %454 = vmatpush1.msra.mxu0 %v453
    %v455 = vand.u32 %v87, 4294901760
    %v456 = vsub.f32 %v87, %v455
    %v457 = vand.u32 %v456, 4294901760
    %v458 = vsub.f32 %v456, %v457
    %v459 = vand.u32 %v458, 4294901760
    %460 = vmatprep.subr.mxu0 %v459
    %v461 = vand.u32 %v86, 4294901760
    %v462 = vsub.f32 %v86, %v461
    %v463 = vand.u32 %v462, 4294901760
    %v464 = vsub.f32 %v462, %v463
    %v465 = vand.u32 %v464, 4294901760
    %466 = vmatpush1.msra.mxu0 %v465
    %v467 = vand.u32 %v89, 4294901760
    %v468 = vsub.f32 %v89, %v467
    %v469 = vand.u32 %v468, 4294901760
    %v470 = vsub.f32 %v468, %v469
    %v471 = vand.u32 %v470, 4294901760
    %472 = vmatprep.subr.mxu0 %v471
    %v473 = vand.u32 %v88, 4294901760
    %v474 = vsub.f32 %v88, %v473
    %v475 = vand.u32 %v474, 4294901760
    %v476 = vsub.f32 %v474, %v475
    %v477 = vand.u32 %v476, 4294901760
    %478 = vmatpush1.msra.mxu0 %v477
    %v479 = vand.u32 %v91, 4294901760
    %v480 = vsub.f32 %v91, %v479
    %v481 = vand.u32 %v480, 4294901760
    %v482 = vsub.f32 %v480, %v481
    %v483 = vand.u32 %v482, 4294901760
    %484 = vmatprep.subr.mxu0 %v483
    %v485 = vand.u32 %v90, 4294901760
    %v486 = vsub.f32 %v90, %v485
    %v487 = vand.u32 %v486, 4294901760
    %v488 = vsub.f32 %v486, %v487
    %v489 = vand.u32 %v488, 4294901760
    %490 = vmatpush1.msra.mxu0 %v489
    %v491 = vand.u32 %v93, 4294901760
    %v492 = vsub.f32 %v93, %v491
    %v493 = vand.u32 %v492, 4294901760
    %v494 = vsub.f32 %v492, %v493
    %v495 = vand.u32 %v494, 4294901760
    %496 = vmatprep.subr.mxu0 %v495
    %v497 = vand.u32 %v92, 4294901760
    %v498 = vsub.f32 %v92, %v497
    %v499 = vand.u32 %v498, 4294901760
    %v500 = vsub.f32 %v498, %v499
    %v501 = vand.u32 %v500, 4294901760
    %502 = vmatpush1.msra.mxu0 %v501
    %v503 = vand.u32 %v95, 4294901760
    %v504 = vsub.f32 %v95, %v503
    %v505 = vand.u32 %v504, 4294901760
    %v506 = vsub.f32 %v504, %v505
    %v507 = vand.u32 %v506, 4294901760
    %508 = vmatprep.subr.mxu0 %v507
    %v509 = vand.u32 %v94, 4294901760
    %v510 = vsub.f32 %v94, %v509
    %v511 = vand.u32 %v510, 4294901760
    %v512 = vsub.f32 %v510, %v511
    %v513 = vand.u32 %v512, 4294901760
    %514 = vmatpush1.msra.mxu0 %v513
    %v515 = vand.u32 %v97, 4294901760
    %v516 = vsub.f32 %v97, %v515
    %v517 = vand.u32 %v516, 4294901760
    %v518 = vsub.f32 %v516, %v517
    %v519 = vand.u32 %v518, 4294901760
    %520 = vmatprep.subr.mxu0 %v519
    %v521 = vand.u32 %v96, 4294901760
    %v522 = vsub.f32 %v96, %v521
    %v523 = vand.u32 %v522, 4294901760
    %v524 = vsub.f32 %v522, %v523
    %v525 = vand.u32 %v524, 4294901760
    %526 = vmatpush1.msra.mxu0 %v525
    %v527 = vand.u32 %v99, 4294901760
    %v528 = vsub.f32 %v99, %v527
    %v529 = vand.u32 %v528, 4294901760
    %v530 = vsub.f32 %v528, %v529
    %v531 = vand.u32 %v530, 4294901760
    %532 = vmatprep.subr.mxu0 %v531
    %v533 = vand.u32 %v98, 4294901760
    %v534 = vsub.f32 %v98, %v533
    %v535 = vand.u32 %v534, 4294901760
    %v536 = vsub.f32 %v534, %v535
    %v537 = vand.u32 %v536, 4294901760
    %538 = vmatpush1.msra.mxu0 %v537
    %v539 = vand.u32 %v101, 4294901760
    %v540 = vsub.f32 %v101, %v539
    %v541 = vand.u32 %v540, 4294901760
    %v542 = vsub.f32 %v540, %v541
    %v543 = vand.u32 %v542, 4294901760
    %544 = vmatprep.subr.mxu0 %v543
    %v545 = vand.u32 %v100, 4294901760
    %v546 = vsub.f32 %v100, %v545
    %v547 = vand.u32 %v546, 4294901760
    %v548 = vsub.f32 %v546, %v547
    %v549 = vand.u32 %v548, 4294901760
    %550 = vmatpush1.msra.mxu0 %v549
    %v551 = vand.u32 %v103, 4294901760
    %v552 = vsub.f32 %v103, %v551
    %v553 = vand.u32 %v552, 4294901760
    %v554 = vsub.f32 %v552, %v553
    %v555 = vand.u32 %v554, 4294901760
    %556 = vmatprep.subr.mxu0 %v555
    %v557 = vand.u32 %v102, 4294901760
    %v558 = vsub.f32 %v102, %v557
    %v559 = vand.u32 %v558, 4294901760
    %v560 = vsub.f32 %v558, %v559
    %v561 = vand.u32 %v560, 4294901760
    %562 = vmatpush1.msra.mxu0 %v561
    %v563 = vand.u32 %v105, 4294901760
    %v564 = vsub.f32 %v105, %v563
    %v565 = vand.u32 %v564, 4294901760
    %v566 = vsub.f32 %v564, %v565
    %v567 = vand.u32 %v566, 4294901760
    %568 = vmatprep.subr.mxu0 %v567
    %v569 = vand.u32 %v104, 4294901760
    %v570 = vsub.f32 %v104, %v569
    %v571 = vand.u32 %v570, 4294901760
    %v572 = vsub.f32 %v570, %v571
    %v573 = vand.u32 %v572, 4294901760
    %574 = vmatpush1.msra.mxu0 %v573
    %v575 = vand.u32 %v107, 4294901760
    %v576 = vsub.f32 %v107, %v575
    %v577 = vand.u32 %v576, 4294901760
    %v578 = vsub.f32 %v576, %v577
    %v579 = vand.u32 %v578, 4294901760
    %580 = vmatprep.subr.mxu0 %v579
    %v581 = vand.u32 %v106, 4294901760
    %v582 = vsub.f32 %v106, %v581
    %v583 = vand.u32 %v582, 4294901760
    %v584 = vsub.f32 %v582, %v583
    %v585 = vand.u32 %v584, 4294901760
    %586 = vmatpush1.msra.mxu0 %v585
    %v587 = vand.u32 %v109, 4294901760
    %v588 = vsub.f32 %v109, %v587
    %v589 = vand.u32 %v588, 4294901760
    %v590 = vsub.f32 %v588, %v589
    %v591 = vand.u32 %v590, 4294901760
    %592 = vmatprep.subr.mxu0 %v591
    %v593 = vand.u32 %v108, 4294901760
    %v594 = vsub.f32 %v108, %v593
    %v595 = vand.u32 %v594, 4294901760
    %v596 = vsub.f32 %v594, %v595
    %v597 = vand.u32 %v596, 4294901760
    %598 = vmatpush1.msra.mxu0 %v597
    %v599 = vand.u32 %v111, 4294901760
    %v600 = vsub.f32 %v111, %v599
    %v601 = vand.u32 %v600, 4294901760
    %v602 = vsub.f32 %v600, %v601
    %v603 = vand.u32 %v602, 4294901760
    %604 = vmatprep.subr.mxu0 %v603
    %v605 = vand.u32 %v110, 4294901760
    %v606 = vsub.f32 %v110, %v605
    %v607 = vand.u32 %v606, 4294901760
    %v608 = vsub.f32 %v606, %v607
    %v609 = vand.u32 %v608, 4294901760
    %610 = vmatpush1.msra.mxu0 %v609
    %v611 = vand.u32 %v113, 4294901760
    %v612 = vsub.f32 %v113, %v611
    %v613 = vand.u32 %v612, 4294901760
    %v614 = vsub.f32 %v612, %v613
    %v615 = vand.u32 %v614, 4294901760
    %616 = vmatprep.subr.mxu0 %v615
    %v617 = vand.u32 %v112, 4294901760
    %v618 = vsub.f32 %v112, %v617
    %v619 = vand.u32 %v618, 4294901760
    %v620 = vsub.f32 %v618, %v619
    %v621 = vand.u32 %v620, 4294901760
    %622 = vmatpush1.msra.mxu0 %v621
    %v623 = vand.u32 %v115, 4294901760
    %v624 = vsub.f32 %v115, %v623
    %v625 = vand.u32 %v624, 4294901760
    %v626 = vsub.f32 %v624, %v625
    %v627 = vand.u32 %v626, 4294901760
    %628 = vmatprep.subr.mxu0 %v627
    %v629 = vand.u32 %v114, 4294901760
    %v630 = vsub.f32 %v114, %v629
    %v631 = vand.u32 %v630, 4294901760
    %v632 = vsub.f32 %v630, %v631
    %v633 = vand.u32 %v632, 4294901760
    %634 = vmatpush1.msra.mxu0 %v633
    %v635 = vand.u32 %v117, 4294901760
    %v636 = vsub.f32 %v117, %v635
    %v637 = vand.u32 %v636, 4294901760
    %v638 = vsub.f32 %v636, %v637
    %v639 = vand.u32 %v638, 4294901760
    %640 = vmatprep.subr.mxu0 %v639
    %v641 = vand.u32 %v116, 4294901760
    %v642 = vsub.f32 %v116, %v641
    %v643 = vand.u32 %v642, 4294901760
    %v644 = vsub.f32 %v642, %v643
    %v645 = vand.u32 %v644, 4294901760
    %646 = vmatpush1.msra.mxu0 %v645
    %v647 = vand.u32 %v53, 4294901760
    %648 = vmatprep.mubr.f32.mxu0 %v647
    %v649 = vand.u32 %v52, 4294901760
    %650 = vmatmul.mubr.f32.gmra.mrb[0].mxu0 %v649
    %v651 = vpop.f32.mrb[0].mxu0
    %v652 = vadd.f32 %v259, %v651
    %v653 = vpop.f32.mrb[0].mxu0
    %v654 = vadd.f32 %v261, %v653
    %655 = vdwg.mxu0
    %v656 = vand.u32 %v55, 4294901760
    %v657 = vsub.f32 %v55, %v656
    %658 = vmatprep.subr.mxu0 %v657
    %v659 = vand.u32 %v54, 4294901760
    %v660 = vsub.f32 %v54, %v659
    %661 = vmatpush1.msra.mxu0 %v660
    %v662 = vand.u32 %v57, 4294901760
    %v663 = vsub.f32 %v57, %v662
    %664 = vmatprep.subr.mxu0 %v663
    %v665 = vand.u32 %v56, 4294901760
    %v666 = vsub.f32 %v56, %v665
    %667 = vmatpush1.msra.mxu0 %v666
    %v668 = vand.u32 %v59, 4294901760
    %v669 = vsub.f32 %v59, %v668
    %670 = vmatprep.subr.mxu0 %v669
    %v671 = vand.u32 %v58, 4294901760
    %v672 = vsub.f32 %v58, %v671
    %673 = vmatpush1.msra.mxu0 %v672
    %v674 = vand.u32 %v61, 4294901760
    %v675 = vsub.f32 %v61, %v674
    %676 = vmatprep.subr.mxu0 %v675
    %v677 = vand.u32 %v60, 4294901760
    %v678 = vsub.f32 %v60, %v677
    %679 = vmatpush1.msra.mxu0 %v678
    %v680 = vand.u32 %v63, 4294901760
    %v681 = vsub.f32 %v63, %v680
    %682 = vmatprep.subr.mxu0 %v681
    %v683 = vand.u32 %v62, 4294901760
    %v684 = vsub.f32 %v62, %v683
    %685 = vmatpush1.msra.mxu0 %v684
    %v686 = vand.u32 %v65, 4294901760
    %v687 = vsub.f32 %v65, %v686
    %688 = vmatprep.subr.mxu0 %v687
    %v689 = vand.u32 %v64, 4294901760
    %v690 = vsub.f32 %v64, %v689
    %691 = vmatpush1.msra.mxu0 %v690
    %v692 = vand.u32 %v67, 4294901760
    %v693 = vsub.f32 %v67, %v692
    %694 = vmatprep.subr.mxu0 %v693
    %v695 = vand.u32 %v66, 4294901760
    %v696 = vsub.f32 %v66, %v695
    %697 = vmatpush1.msra.mxu0 %v696
    %v698 = vand.u32 %v69, 4294901760
    %v699 = vsub.f32 %v69, %v698
    %700 = vmatprep.subr.mxu0 %v699
    %v701 = vand.u32 %v68, 4294901760
    %v702 = vsub.f32 %v68, %v701
    %703 = vmatpush1.msra.mxu0 %v702
    %v704 = vand.u32 %v71, 4294901760
    %v705 = vsub.f32 %v71, %v704
    %706 = vmatprep.subr.mxu0 %v705
    %v707 = vand.u32 %v70, 4294901760
    %v708 = vsub.f32 %v70, %v707
    %709 = vmatpush1.msra.mxu0 %v708
    %v710 = vand.u32 %v73, 4294901760
    %v711 = vsub.f32 %v73, %v710
    %712 = vmatprep.subr.mxu0 %v711
    %v713 = vand.u32 %v72, 4294901760
    %v714 = vsub.f32 %v72, %v713
    %715 = vmatpush1.msra.mxu0 %v714
    %v716 = vand.u32 %v75, 4294901760
    %v717 = vsub.f32 %v75, %v716
    %718 = vmatprep.subr.mxu0 %v717
    %v719 = vand.u32 %v74, 4294901760
    %v720 = vsub.f32 %v74, %v719
    %721 = vmatpush1.msra.mxu0 %v720
    %v722 = vand.u32 %v77, 4294901760
    %v723 = vsub.f32 %v77, %v722
    %724 = vmatprep.subr.mxu0 %v723
    %v725 = vand.u32 %v76, 4294901760
    %v726 = vsub.f32 %v76, %v725
    %727 = vmatpush1.msra.mxu0 %v726
    %v728 = vand.u32 %v79, 4294901760
    %v729 = vsub.f32 %v79, %v728
    %730 = vmatprep.subr.mxu0 %v729
    %v731 = vand.u32 %v78, 4294901760
    %v732 = vsub.f32 %v78, %v731
    %733 = vmatpush1.msra.mxu0 %v732
    %v734 = vand.u32 %v81, 4294901760
    %v735 = vsub.f32 %v81, %v734
    %736 = vmatprep.subr.mxu0 %v735
    %v737 = vand.u32 %v80, 4294901760
    %v738 = vsub.f32 %v80, %v737
    %739 = vmatpush1.msra.mxu0 %v738
    %v740 = vand.u32 %v83, 4294901760
    %v741 = vsub.f32 %v83, %v740
    %742 = vmatprep.subr.mxu0 %v741
    %v743 = vand.u32 %v82, 4294901760
    %v744 = vsub.f32 %v82, %v743
    %745 = vmatpush1.msra.mxu0 %v744
    %v746 = vand.u32 %v85, 4294901760
    %v747 = vsub.f32 %v85, %v746
    %748 = vmatprep.subr.mxu0 %v747
    %v749 = vand.u32 %v84, 4294901760
    %v750 = vsub.f32 %v84, %v749
    %751 = vmatpush1.msra.mxu0 %v750
    %v752 = vand.u32 %v87, 4294901760
    %v753 = vsub.f32 %v87, %v752
    %754 = vmatprep.subr.mxu0 %v753
    %v755 = vand.u32 %v86, 4294901760
    %v756 = vsub.f32 %v86, %v755
    %757 = vmatpush1.msra.mxu0 %v756
    %v758 = vand.u32 %v89, 4294901760
    %v759 = vsub.f32 %v89, %v758
    %760 = vmatprep.subr.mxu0 %v759
    %v761 = vand.u32 %v88, 4294901760
    %v762 = vsub.f32 %v88, %v761
    %763 = vmatpush1.msra.mxu0 %v762
    %v764 = vand.u32 %v91, 4294901760
    %v765 = vsub.f32 %v91, %v764
    %766 = vmatprep.subr.mxu0 %v765
    %v767 = vand.u32 %v90, 4294901760
    %v768 = vsub.f32 %v90, %v767
    %769 = vmatpush1.msra.mxu0 %v768
    %v770 = vand.u32 %v93, 4294901760
    %v771 = vsub.f32 %v93, %v770
    %772 = vmatprep.subr.mxu0 %v771
    %v773 = vand.u32 %v92, 4294901760
    %v774 = vsub.f32 %v92, %v773
    %775 = vmatpush1.msra.mxu0 %v774
    %v776 = vand.u32 %v95, 4294901760
    %v777 = vsub.f32 %v95, %v776
    %778 = vmatprep.subr.mxu0 %v777
    %v779 = vand.u32 %v94, 4294901760
    %v780 = vsub.f32 %v94, %v779
    %781 = vmatpush1.msra.mxu0 %v780
    %v782 = vand.u32 %v97, 4294901760
    %v783 = vsub.f32 %v97, %v782
    %784 = vmatprep.subr.mxu0 %v783
    %v785 = vand.u32 %v96, 4294901760
    %v786 = vsub.f32 %v96, %v785
    %787 = vmatpush1.msra.mxu0 %v786
    %v788 = vand.u32 %v99, 4294901760
    %v789 = vsub.f32 %v99, %v788
    %790 = vmatprep.subr.mxu0 %v789
    %v791 = vand.u32 %v98, 4294901760
    %v792 = vsub.f32 %v98, %v791
    %793 = vmatpush1.msra.mxu0 %v792
    %v794 = vand.u32 %v101, 4294901760
    %v795 = vsub.f32 %v101, %v794
    %796 = vmatprep.subr.mxu0 %v795
    %v797 = vand.u32 %v100, 4294901760
    %v798 = vsub.f32 %v100, %v797
    %799 = vmatpush1.msra.mxu0 %v798
    %v800 = vand.u32 %v103, 4294901760
    %v801 = vsub.f32 %v103, %v800
    %802 = vmatprep.subr.mxu0 %v801
    %v803 = vand.u32 %v102, 4294901760
    %v804 = vsub.f32 %v102, %v803
    %805 = vmatpush1.msra.mxu0 %v804
    %v806 = vand.u32 %v105, 4294901760
    %v807 = vsub.f32 %v105, %v806
    %808 = vmatprep.subr.mxu0 %v807
    %v809 = vand.u32 %v104, 4294901760
    %v810 = vsub.f32 %v104, %v809
    %811 = vmatpush1.msra.mxu0 %v810
    %v812 = vand.u32 %v107, 4294901760
    %v813 = vsub.f32 %v107, %v812
    %814 = vmatprep.subr.mxu0 %v813
    %v815 = vand.u32 %v106, 4294901760
    %v816 = vsub.f32 %v106, %v815
    %817 = vmatpush1.msra.mxu0 %v816
    %v818 = vand.u32 %v109, 4294901760
    %v819 = vsub.f32 %v109, %v818
    %820 = vmatprep.subr.mxu0 %v819
    %v821 = vand.u32 %v108, 4294901760
    %v822 = vsub.f32 %v108, %v821
    %823 = vmatpush1.msra.mxu0 %v822
    %v824 = vand.u32 %v111, 4294901760
    %v825 = vsub.f32 %v111, %v824
    %826 = vmatprep.subr.mxu0 %v825
    %v827 = vand.u32 %v110, 4294901760
    %v828 = vsub.f32 %v110, %v827
    %829 = vmatpush1.msra.mxu0 %v828
    %v830 = vand.u32 %v113, 4294901760
    %v831 = vsub.f32 %v113, %v830
    %832 = vmatprep.subr.mxu0 %v831
    %v833 = vand.u32 %v112, 4294901760
    %v834 = vsub.f32 %v112, %v833
    %835 = vmatpush1.msra.mxu0 %v834
    %v836 = vand.u32 %v115, 4294901760
    %v837 = vsub.f32 %v115, %v836
    %838 = vmatprep.subr.mxu0 %v837
    %v839 = vand.u32 %v114, 4294901760
    %v840 = vsub.f32 %v114, %v839
    %841 = vmatpush1.msra.mxu0 %v840
    %v842 = vand.u32 %v117, 4294901760
    %v843 = vsub.f32 %v117, %v842
    %844 = vmatprep.subr.mxu0 %v843
    %v845 = vand.u32 %v116, 4294901760
    %v846 = vsub.f32 %v116, %v845
    %847 = vmatpush1.msra.mxu0 %v846
    %v848 = vand.u32 %v53, 4294901760
    %v849 = vsub.f32 %v53, %v848
    %850 = vmatprep.mubr.f32.mxu0 %v849
    %v851 = vand.u32 %v52, 4294901760
    %v852 = vsub.f32 %v52, %v851
    %853 = vmatmul.mubr.f32.gmra.mrb[0].mxu0 %v852
    %v854 = vpop.f32.mrb[0].mxu0
    %v855 = vadd.f32 %v652, %v854
    %v856 = vpop.f32.mrb[0].mxu0
    %v857 = vadd.f32 %v654, %v856
    %858 = vdwg.mxu0
    %v859 = vand.u32 %v55, 4294901760
    %860 = vmatprep.subr.mxu0 %v859
    %v861 = vand.u32 %v54, 4294901760
    %862 = vmatpush1.msra.mxu0 %v861
    %v863 = vand.u32 %v57, 4294901760
    %864 = vmatprep.subr.mxu0 %v863
    %v865 = vand.u32 %v56, 4294901760
    %866 = vmatpush1.msra.mxu0 %v865
    %v867 = vand.u32 %v59, 4294901760
    %868 = vmatprep.subr.mxu0 %v867
    %v869 = vand.u32 %v58, 4294901760
    %870 = vmatpush1.msra.mxu0 %v869
    %v871 = vand.u32 %v61, 4294901760
    %872 = vmatprep.subr.mxu0 %v871
    %v873 = vand.u32 %v60, 4294901760
    %874 = vmatpush1.msra.mxu0 %v873
    %v875 = vand.u32 %v63, 4294901760
    %876 = vmatprep.subr.mxu0 %v875
    %v877 = vand.u32 %v62, 4294901760
    %878 = vmatpush1.msra.mxu0 %v877
    %v879 = vand.u32 %v65, 4294901760
    %880 = vmatprep.subr.mxu0 %v879
    %v881 = vand.u32 %v64, 4294901760
    %882 = vmatpush1.msra.mxu0 %v881
    %v883 = vand.u32 %v67, 4294901760
    %884 = vmatprep.subr.mxu0 %v883
    %v885 = vand.u32 %v66, 4294901760
    %886 = vmatpush1.msra.mxu0 %v885
    %v887 = vand.u32 %v69, 4294901760
    %888 = vmatprep.subr.mxu0 %v887
    %v889 = vand.u32 %v68, 4294901760
    %890 = vmatpush1.msra.mxu0 %v889
    %v891 = vand.u32 %v71, 4294901760
    %892 = vmatprep.subr.mxu0 %v891
    %v893 = vand.u32 %v70, 4294901760
    %894 = vmatpush1.msra.mxu0 %v893
    %v895 = vand.u32 %v73, 4294901760
    %896 = vmatprep.subr.mxu0 %v895
    %v897 = vand.u32 %v72, 4294901760
    %898 = vmatpush1.msra.mxu0 %v897
    %v899 = vand.u32 %v75, 4294901760
    %900 = vmatprep.subr.mxu0 %v899
    %v901 = vand.u32 %v74, 4294901760
    %902 = vmatpush1.msra.mxu0 %v901
    %v903 = vand.u32 %v77, 4294901760
    %904 = vmatprep.subr.mxu0 %v903
    %v905 = vand.u32 %v76, 4294901760
    %906 = vmatpush1.msra.mxu0 %v905
    %v907 = vand.u32 %v79, 4294901760
    %908 = vmatprep.subr.mxu0 %v907
    %v909 = vand.u32 %v78, 4294901760
    %910 = vmatpush1.msra.mxu0 %v909
    %v911 = vand.u32 %v81, 4294901760
    %912 = vmatprep.subr.mxu0 %v911
    %v913 = vand.u32 %v80, 4294901760
    %914 = vmatpush1.msra.mxu0 %v913
    %v915 = vand.u32 %v83, 4294901760
    %916 = vmatprep.subr.mxu0 %v915
    %v917 = vand.u32 %v82, 4294901760
    %918 = vmatpush1.msra.mxu0 %v917
    %v919 = vand.u32 %v85, 4294901760
    %920 = vmatprep.subr.mxu0 %v919
    %v921 = vand.u32 %v84, 4294901760
    %922 = vmatpush1.msra.mxu0 %v921
    %v923 = vand.u32 %v87, 4294901760
    %924 = vmatprep.subr.mxu0 %v923
    %v925 = vand.u32 %v86, 4294901760
    %926 = vmatpush1.msra.mxu0 %v925
    %v927 = vand.u32 %v89, 4294901760
    %928 = vmatprep.subr.mxu0 %v927
    %v929 = vand.u32 %v88, 4294901760
    %930 = vmatpush1.msra.mxu0 %v929
    %v931 = vand.u32 %v91, 4294901760
    %932 = vmatprep.subr.mxu0 %v931
    %v933 = vand.u32 %v90, 4294901760
    %934 = vmatpush1.msra.mxu0 %v933
    %v935 = vand.u32 %v93, 4294901760
    %936 = vmatprep.subr.mxu0 %v935
    %v937 = vand.u32 %v92, 4294901760
    %938 = vmatpush1.msra.mxu0 %v937
    %v939 = vand.u32 %v95, 4294901760
    %940 = vmatprep.subr.mxu0 %v939
    %v941 = vand.u32 %v94, 4294901760
    %942 = vmatpush1.msra.mxu0 %v941
    %v943 = vand.u32 %v97, 4294901760
    %944 = vmatprep.subr.mxu0 %v943
    %v945 = vand.u32 %v96, 4294901760
    %946 = vmatpush1.msra.mxu0 %v945
    %v947 = vand.u32 %v99, 4294901760
    %948 = vmatprep.subr.mxu0 %v947
    %v949 = vand.u32 %v98, 4294901760
    %950 = vmatpush1.msra.mxu0 %v949
    %v951 = vand.u32 %v101, 4294901760
    %952 = vmatprep.subr.mxu0 %v951
    %v953 = vand.u32 %v100, 4294901760
    %954 = vmatpush1.msra.mxu0 %v953
    %v955 = vand.u32 %v103, 4294901760
    %956 = vmatprep.subr.mxu0 %v955
    %v957 = vand.u32 %v102, 4294901760
    %958 = vmatpush1.msra.mxu0 %v957
    %v959 = vand.u32 %v105, 4294901760
    %960 = vmatprep.subr.mxu0 %v959
    %v961 = vand.u32 %v104, 4294901760
    %962 = vmatpush1.msra.mxu0 %v961
    %v963 = vand.u32 %v107, 4294901760
    %964 = vmatprep.subr.mxu0 %v963
    %v965 = vand.u32 %v106, 4294901760
    %966 = vmatpush1.msra.mxu0 %v965
    %v967 = vand.u32 %v109, 4294901760
    %968 = vmatprep.subr.mxu0 %v967
    %v969 = vand.u32 %v108, 4294901760
    %970 = vmatpush1.msra.mxu0 %v969
    %v971 = vand.u32 %v111, 4294901760
    %972 = vmatprep.subr.mxu0 %v971
    %v973 = vand.u32 %v110, 4294901760
    %974 = vmatpush1.msra.mxu0 %v973
    %v975 = vand.u32 %v113, 4294901760
    %976 = vmatprep.subr.mxu0 %v975
    %v977 = vand.u32 %v112, 4294901760
    %978 = vmatpush1.msra.mxu0 %v977
    %v979 = vand.u32 %v115, 4294901760
    %980 = vmatprep.subr.mxu0 %v979
    %v981 = vand.u32 %v114, 4294901760
    %982 = vmatpush1.msra.mxu0 %v981
    %v983 = vand.u32 %v117, 4294901760
    %984 = vmatprep.subr.mxu0 %v983
    %v985 = vand.u32 %v116, 4294901760
    %986 = vmatpush1.msra.mxu0 %v985
    %v987 = vand.u32 %v53, 4294901760
    %v988 = vsub.f32 %v53, %v987
    %v989 = vand.u32 %v988, 4294901760
    %990 = vmatprep.mubr.f32.mxu0 %v989
    %v991 = vand.u32 %v52, 4294901760
    %v992 = vsub.f32 %v52, %v991
    %v993 = vand.u32 %v992, 4294901760
    %994 = vmatmul.mubr.f32.gmra.mrb[0].mxu0 %v993
    %v995 = vpop.f32.mrb[0].mxu0
    %v996 = vadd.f32 %v855, %v995
    %v997 = vpop.f32.mrb[0].mxu0
    %v998 = vadd.f32 %v857, %v997
    %999 = vdwg.mxu0
    %v1000 = vand.u32 %v55, 4294901760
    %v1001 = vsub.f32 %v55, %v1000
    %v1002 = vand.u32 %v1001, 4294901760
    %1003 = vmatprep.subr.mxu0 %v1002
    %v1004 = vand.u32 %v54, 4294901760
    %v1005 = vsub.f32 %v54, %v1004
    %v1006 = vand.u32 %v1005, 4294901760
    %1007 = vmatpush1.msra.mxu0 %v1006
    %v1008 = vand.u32 %v57, 4294901760
    %v1009 = vsub.f32 %v57, %v1008
    %v1010 = vand.u32 %v1009, 4294901760
    %1011 = vmatprep.subr.mxu0 %v1010
    %v1012 = vand.u32 %v56, 4294901760
    %v1013 = vsub.f32 %v56, %v1012
    %v1014 = vand.u32 %v1013, 4294901760
    %1015 = vmatpush1.msra.mxu0 %v1014
    %v1016 = vand.u32 %v59, 4294901760
    %v1017 = vsub.f32 %v59, %v1016
    %v1018 = vand.u32 %v1017, 4294901760
    %1019 = vmatprep.subr.mxu0 %v1018
    %v1020 = vand.u32 %v58, 4294901760
    %v1021 = vsub.f32 %v58, %v1020
    %v1022 = vand.u32 %v1021, 4294901760
    %1023 = vmatpush1.msra.mxu0 %v1022
    %v1024 = vand.u32 %v61, 4294901760
    %v1025 = vsub.f32 %v61, %v1024
    %v1026 = vand.u32 %v1025, 4294901760
    %1027 = vmatprep.subr.mxu0 %v1026
    %v1028 = vand.u32 %v60, 4294901760
    %v1029 = vsub.f32 %v60, %v1028
    %v1030 = vand.u32 %v1029, 4294901760
    %1031 = vmatpush1.msra.mxu0 %v1030
    %v1032 = vand.u32 %v63, 4294901760
    %v1033 = vsub.f32 %v63, %v1032
    %v1034 = vand.u32 %v1033, 4294901760
    %1035 = vmatprep.subr.mxu0 %v1034
    %v1036 = vand.u32 %v62, 4294901760
    %v1037 = vsub.f32 %v62, %v1036
    %v1038 = vand.u32 %v1037, 4294901760
    %1039 = vmatpush1.msra.mxu0 %v1038
    %v1040 = vand.u32 %v65, 4294901760
    %v1041 = vsub.f32 %v65, %v1040
    %v1042 = vand.u32 %v1041, 4294901760
    %1043 = vmatprep.subr.mxu0 %v1042
    %v1044 = vand.u32 %v64, 4294901760
    %v1045 = vsub.f32 %v64, %v1044
    %v1046 = vand.u32 %v1045, 4294901760
    %1047 = vmatpush1.msra.mxu0 %v1046
    %v1048 = vand.u32 %v67, 4294901760
    %v1049 = vsub.f32 %v67, %v1048
    %v1050 = vand.u32 %v1049, 4294901760
    %1051 = vmatprep.subr.mxu0 %v1050
    %v1052 = vand.u32 %v66, 4294901760
    %v1053 = vsub.f32 %v66, %v1052
    %v1054 = vand.u32 %v1053, 4294901760
    %1055 = vmatpush1.msra.mxu0 %v1054
    %v1056 = vand.u32 %v69, 4294901760
    %v1057 = vsub.f32 %v69, %v1056
    %v1058 = vand.u32 %v1057, 4294901760
    %1059 = vmatprep.subr.mxu0 %v1058
    %v1060 = vand.u32 %v68, 4294901760
    %v1061 = vsub.f32 %v68, %v1060
    %v1062 = vand.u32 %v1061, 4294901760
    %1063 = vmatpush1.msra.mxu0 %v1062
    %v1064 = vand.u32 %v71, 4294901760
    %v1065 = vsub.f32 %v71, %v1064
    %v1066 = vand.u32 %v1065, 4294901760
    %1067 = vmatprep.subr.mxu0 %v1066
    %v1068 = vand.u32 %v70, 4294901760
    %v1069 = vsub.f32 %v70, %v1068
    %v1070 = vand.u32 %v1069, 4294901760
    %1071 = vmatpush1.msra.mxu0 %v1070
    %v1072 = vand.u32 %v73, 4294901760
    %v1073 = vsub.f32 %v73, %v1072
    %v1074 = vand.u32 %v1073, 4294901760
    %1075 = vmatprep.subr.mxu0 %v1074
    %v1076 = vand.u32 %v72, 4294901760
    %v1077 = vsub.f32 %v72, %v1076
    %v1078 = vand.u32 %v1077, 4294901760
    %1079 = vmatpush1.msra.mxu0 %v1078
    %v1080 = vand.u32 %v75, 4294901760
    %v1081 = vsub.f32 %v75, %v1080
    %v1082 = vand.u32 %v1081, 4294901760
    %1083 = vmatprep.subr.mxu0 %v1082
    %v1084 = vand.u32 %v74, 4294901760
    %v1085 = vsub.f32 %v74, %v1084
    %v1086 = vand.u32 %v1085, 4294901760
    %1087 = vmatpush1.msra.mxu0 %v1086
    %v1088 = vand.u32 %v77, 4294901760
    %v1089 = vsub.f32 %v77, %v1088
    %v1090 = vand.u32 %v1089, 4294901760
    %1091 = vmatprep.subr.mxu0 %v1090
    %v1092 = vand.u32 %v76, 4294901760
    %v1093 = vsub.f32 %v76, %v1092
    %v1094 = vand.u32 %v1093, 4294901760
    %1095 = vmatpush1.msra.mxu0 %v1094
    %v1096 = vand.u32 %v79, 4294901760
    %v1097 = vsub.f32 %v79, %v1096
    %v1098 = vand.u32 %v1097, 4294901760
    %1099 = vmatprep.subr.mxu0 %v1098
    %v1100 = vand.u32 %v78, 4294901760
    %v1101 = vsub.f32 %v78, %v1100
    %v1102 = vand.u32 %v1101, 4294901760
    %1103 = vmatpush1.msra.mxu0 %v1102
    %v1104 = vand.u32 %v81, 4294901760
    %v1105 = vsub.f32 %v81, %v1104
    %v1106 = vand.u32 %v1105, 4294901760
    %1107 = vmatprep.subr.mxu0 %v1106
    %v1108 = vand.u32 %v80, 4294901760
    %v1109 = vsub.f32 %v80, %v1108
    %v1110 = vand.u32 %v1109, 4294901760
    %1111 = vmatpush1.msra.mxu0 %v1110
    %v1112 = vand.u32 %v83, 4294901760
    %v1113 = vsub.f32 %v83, %v1112
    %v1114 = vand.u32 %v1113, 4294901760
    %1115 = vmatprep.subr.mxu0 %v1114
    %v1116 = vand.u32 %v82, 4294901760
    %v1117 = vsub.f32 %v82, %v1116
    %v1118 = vand.u32 %v1117, 4294901760
    %1119 = vmatpush1.msra.mxu0 %v1118
    %v1120 = vand.u32 %v85, 4294901760
    %v1121 = vsub.f32 %v85, %v1120
    %v1122 = vand.u32 %v1121, 4294901760
    %1123 = vmatprep.subr.mxu0 %v1122
    %v1124 = vand.u32 %v84, 4294901760
    %v1125 = vsub.f32 %v84, %v1124
    %v1126 = vand.u32 %v1125, 4294901760
    %1127 = vmatpush1.msra.mxu0 %v1126
    %v1128 = vand.u32 %v87, 4294901760
    %v1129 = vsub.f32 %v87, %v1128
    %v1130 = vand.u32 %v1129, 4294901760
    %1131 = vmatprep.subr.mxu0 %v1130
    %v1132 = vand.u32 %v86, 4294901760
    %v1133 = vsub.f32 %v86, %v1132
    %v1134 = vand.u32 %v1133, 4294901760
    %1135 = vmatpush1.msra.mxu0 %v1134
    %v1136 = vand.u32 %v89, 4294901760
    %v1137 = vsub.f32 %v89, %v1136
    %v1138 = vand.u32 %v1137, 4294901760
    %1139 = vmatprep.subr.mxu0 %v1138
    %v1140 = vand.u32 %v88, 4294901760
    %v1141 = vsub.f32 %v88, %v1140
    %v1142 = vand.u32 %v1141, 4294901760
    %1143 = vmatpush1.msra.mxu0 %v1142
    %v1144 = vand.u32 %v91, 4294901760
    %v1145 = vsub.f32 %v91, %v1144
    %v1146 = vand.u32 %v1145, 4294901760
    %1147 = vmatprep.subr.mxu0 %v1146
    %v1148 = vand.u32 %v90, 4294901760
    %v1149 = vsub.f32 %v90, %v1148
    %v1150 = vand.u32 %v1149, 4294901760
    %1151 = vmatpush1.msra.mxu0 %v1150
    %v1152 = vand.u32 %v93, 4294901760
    %v1153 = vsub.f32 %v93, %v1152
    %v1154 = vand.u32 %v1153, 4294901760
    %1155 = vmatprep.subr.mxu0 %v1154
    %v1156 = vand.u32 %v92, 4294901760
    %v1157 = vsub.f32 %v92, %v1156
    %v1158 = vand.u32 %v1157, 4294901760
    %1159 = vmatpush1.msra.mxu0 %v1158
    %v1160 = vand.u32 %v95, 4294901760
    %v1161 = vsub.f32 %v95, %v1160
    %v1162 = vand.u32 %v1161, 4294901760
    %1163 = vmatprep.subr.mxu0 %v1162
    %v1164 = vand.u32 %v94, 4294901760
    %v1165 = vsub.f32 %v94, %v1164
    %v1166 = vand.u32 %v1165, 4294901760
    %1167 = vmatpush1.msra.mxu0 %v1166
    %v1168 = vand.u32 %v97, 4294901760
    %v1169 = vsub.f32 %v97, %v1168
    %v1170 = vand.u32 %v1169, 4294901760
    %1171 = vmatprep.subr.mxu0 %v1170
    %v1172 = vand.u32 %v96, 4294901760
    %v1173 = vsub.f32 %v96, %v1172
    %v1174 = vand.u32 %v1173, 4294901760
    %1175 = vmatpush1.msra.mxu0 %v1174
    %v1176 = vand.u32 %v99, 4294901760
    %v1177 = vsub.f32 %v99, %v1176
    %v1178 = vand.u32 %v1177, 4294901760
    %1179 = vmatprep.subr.mxu0 %v1178
    %v1180 = vand.u32 %v98, 4294901760
    %v1181 = vsub.f32 %v98, %v1180
    %v1182 = vand.u32 %v1181, 4294901760
    %1183 = vmatpush1.msra.mxu0 %v1182
    %v1184 = vand.u32 %v101, 4294901760
    %v1185 = vsub.f32 %v101, %v1184
    %v1186 = vand.u32 %v1185, 4294901760
    %1187 = vmatprep.subr.mxu0 %v1186
    %v1188 = vand.u32 %v100, 4294901760
    %v1189 = vsub.f32 %v100, %v1188
    %v1190 = vand.u32 %v1189, 4294901760
    %1191 = vmatpush1.msra.mxu0 %v1190
    %v1192 = vand.u32 %v103, 4294901760
    %v1193 = vsub.f32 %v103, %v1192
    %v1194 = vand.u32 %v1193, 4294901760
    %1195 = vmatprep.subr.mxu0 %v1194
    %v1196 = vand.u32 %v102, 4294901760
    %v1197 = vsub.f32 %v102, %v1196
    %v1198 = vand.u32 %v1197, 4294901760
    %1199 = vmatpush1.msra.mxu0 %v1198
    %v1200 = vand.u32 %v105, 4294901760
    %v1201 = vsub.f32 %v105, %v1200
    %v1202 = vand.u32 %v1201, 4294901760
    %1203 = vmatprep.subr.mxu0 %v1202
    %v1204 = vand.u32 %v104, 4294901760
    %v1205 = vsub.f32 %v104, %v1204
    %v1206 = vand.u32 %v1205, 4294901760
    %1207 = vmatpush1.msra.mxu0 %v1206
    %v1208 = vand.u32 %v107, 4294901760
    %v1209 = vsub.f32 %v107, %v1208
    %v1210 = vand.u32 %v1209, 4294901760
    %1211 = vmatprep.subr.mxu0 %v1210
    %v1212 = vand.u32 %v106, 4294901760
    %v1213 = vsub.f32 %v106, %v1212
    %v1214 = vand.u32 %v1213, 4294901760
    %1215 = vmatpush1.msra.mxu0 %v1214
    %v1216 = vand.u32 %v109, 4294901760
    %v1217 = vsub.f32 %v109, %v1216
    %v1218 = vand.u32 %v1217, 4294901760
    %1219 = vmatprep.subr.mxu0 %v1218
    %v1220 = vand.u32 %v108, 4294901760
    %v1221 = vsub.f32 %v108, %v1220
    %v1222 = vand.u32 %v1221, 4294901760
    %1223 = vmatpush1.msra.mxu0 %v1222
    %v1224 = vand.u32 %v111, 4294901760
    %v1225 = vsub.f32 %v111, %v1224
    %v1226 = vand.u32 %v1225, 4294901760
    %1227 = vmatprep.subr.mxu0 %v1226
    %v1228 = vand.u32 %v110, 4294901760
    %v1229 = vsub.f32 %v110, %v1228
    %v1230 = vand.u32 %v1229, 4294901760
    %1231 = vmatpush1.msra.mxu0 %v1230
    %v1232 = vand.u32 %v113, 4294901760
    %v1233 = vsub.f32 %v113, %v1232
    %v1234 = vand.u32 %v1233, 4294901760
    %1235 = vmatprep.subr.mxu0 %v1234
    %v1236 = vand.u32 %v112, 4294901760
    %v1237 = vsub.f32 %v112, %v1236
    %v1238 = vand.u32 %v1237, 4294901760
    %1239 = vmatpush1.msra.mxu0 %v1238
    %v1240 = vand.u32 %v115, 4294901760
    %v1241 = vsub.f32 %v115, %v1240
    %v1242 = vand.u32 %v1241, 4294901760
    %1243 = vmatprep.subr.mxu0 %v1242
    %v1244 = vand.u32 %v114, 4294901760
    %v1245 = vsub.f32 %v114, %v1244
    %v1246 = vand.u32 %v1245, 4294901760
    %1247 = vmatpush1.msra.mxu0 %v1246
    %v1248 = vand.u32 %v117, 4294901760
    %v1249 = vsub.f32 %v117, %v1248
    %v1250 = vand.u32 %v1249, 4294901760
    %1251 = vmatprep.subr.mxu0 %v1250
    %v1252 = vand.u32 %v116, 4294901760
    %v1253 = vsub.f32 %v116, %v1252
    %v1254 = vand.u32 %v1253, 4294901760
    %1255 = vmatpush1.msra.mxu0 %v1254
    %v1256 = vand.u32 %v53, 4294901760
    %1257 = vmatprep.mubr.f32.mxu0 %v1256
    %v1258 = vand.u32 %v52, 4294901760
    %1259 = vmatmul.mubr.f32.gmra.mrb[0].mxu0 %v1258
    %v1260 = vpop.f32.mrb[0].mxu0
    %v1261 = vadd.f32 %v996, %v1260
    %v1262 = vpop.f32.mrb[0].mxu0
    %v1263 = vadd.f32 %v998, %v1262
    %1264 = vdwg.mxu0
    %v1265 = vand.u32 %v55, 4294901760
    %1266 = vmatprep.subr.mxu0 %v1265
    %v1267 = vand.u32 %v54, 4294901760
    %1268 = vmatpush1.msra.mxu0 %v1267
    %v1269 = vand.u32 %v57, 4294901760
    %1270 = vmatprep.subr.mxu0 %v1269
    %v1271 = vand.u32 %v56, 4294901760
    %1272 = vmatpush1.msra.mxu0 %v1271
    %v1273 = vand.u32 %v59, 4294901760
    %1274 = vmatprep.subr.mxu0 %v1273
    %v1275 = vand.u32 %v58, 4294901760
    %1276 = vmatpush1.msra.mxu0 %v1275
    %v1277 = vand.u32 %v61, 4294901760
    %1278 = vmatprep.subr.mxu0 %v1277
    %v1279 = vand.u32 %v60, 4294901760
    %1280 = vmatpush1.msra.mxu0 %v1279
    %v1281 = vand.u32 %v63, 4294901760
    %1282 = vmatprep.subr.mxu0 %v1281
    %v1283 = vand.u32 %v62, 4294901760
    %1284 = vmatpush1.msra.mxu0 %v1283
    %v1285 = vand.u32 %v65, 4294901760
    %1286 = vmatprep.subr.mxu0 %v1285
    %v1287 = vand.u32 %v64, 4294901760
    %1288 = vmatpush1.msra.mxu0 %v1287
    %v1289 = vand.u32 %v67, 4294901760
    %1290 = vmatprep.subr.mxu0 %v1289
    %v1291 = vand.u32 %v66, 4294901760
    %1292 = vmatpush1.msra.mxu0 %v1291
    %v1293 = vand.u32 %v69, 4294901760
    %1294 = vmatprep.subr.mxu0 %v1293
    %v1295 = vand.u32 %v68, 4294901760
    %1296 = vmatpush1.msra.mxu0 %v1295
    %v1297 = vand.u32 %v71, 4294901760
    %1298 = vmatprep.subr.mxu0 %v1297
    %v1299 = vand.u32 %v70, 4294901760
    %1300 = vmatpush1.msra.mxu0 %v1299
    %v1301 = vand.u32 %v73, 4294901760
    %1302 = vmatprep.subr.mxu0 %v1301
    %v1303 = vand.u32 %v72, 4294901760
    %1304 = vmatpush1.msra.mxu0 %v1303
    %v1305 = vand.u32 %v75, 4294901760
    %1306 = vmatprep.subr.mxu0 %v1305
    %v1307 = vand.u32 %v74, 4294901760
    %1308 = vmatpush1.msra.mxu0 %v1307
    %v1309 = vand.u32 %v77, 4294901760
    %1310 = vmatprep.subr.mxu0 %v1309
    %v1311 = vand.u32 %v76, 4294901760
    %1312 = vmatpush1.msra.mxu0 %v1311
    %v1313 = vand.u32 %v79, 4294901760
    %1314 = vmatprep.subr.mxu0 %v1313
    %v1315 = vand.u32 %v78, 4294901760
    %1316 = vmatpush1.msra.mxu0 %v1315
    %v1317 = vand.u32 %v81, 4294901760
    %1318 = vmatprep.subr.mxu0 %v1317
    %v1319 = vand.u32 %v80, 4294901760
    %1320 = vmatpush1.msra.mxu0 %v1319
    %v1321 = vand.u32 %v83, 4294901760
    %1322 = vmatprep.subr.mxu0 %v1321
    %v1323 = vand.u32 %v82, 4294901760
    %1324 = vmatpush1.msra.mxu0 %v1323
    %v1325 = vand.u32 %v85, 4294901760
    %1326 = vmatprep.subr.mxu0 %v1325
    %v1327 = vand.u32 %v84, 4294901760
    %1328 = vmatpush1.msra.mxu0 %v1327
    %v1329 = vand.u32 %v87, 4294901760
    %1330 = vmatprep.subr.mxu0 %v1329
    %v1331 = vand.u32 %v86, 4294901760
    %1332 = vmatpush1.msra.mxu0 %v1331
    %v1333 = vand.u32 %v89, 4294901760
    %1334 = vmatprep.subr.mxu0 %v1333
    %v1335 = vand.u32 %v88, 4294901760
    %1336 = vmatpush1.msra.mxu0 %v1335
    %v1337 = vand.u32 %v91, 4294901760
    %1338 = vmatprep.subr.mxu0 %v1337
    %v1339 = vand.u32 %v90, 4294901760
    %1340 = vmatpush1.msra.mxu0 %v1339
    %v1341 = vand.u32 %v93, 4294901760
    %1342 = vmatprep.subr.mxu0 %v1341
    %v1343 = vand.u32 %v92, 4294901760
    %1344 = vmatpush1.msra.mxu0 %v1343
    %v1345 = vand.u32 %v95, 4294901760
    %1346 = vmatprep.subr.mxu0 %v1345
    %v1347 = vand.u32 %v94, 4294901760
    %1348 = vmatpush1.msra.mxu0 %v1347
    %v1349 = vand.u32 %v97, 4294901760
    %1350 = vmatprep.subr.mxu0 %v1349
    %v1351 = vand.u32 %v96, 4294901760
    %1352 = vmatpush1.msra.mxu0 %v1351
    %v1353 = vand.u32 %v99, 4294901760
    %1354 = vmatprep.subr.mxu0 %v1353
    %v1355 = vand.u32 %v98, 4294901760
    %1356 = vmatpush1.msra.mxu0 %v1355
    %v1357 = vand.u32 %v101, 4294901760
    %1358 = vmatprep.subr.mxu0 %v1357
    %v1359 = vand.u32 %v100, 4294901760
    %1360 = vmatpush1.msra.mxu0 %v1359
    %v1361 = vand.u32 %v103, 4294901760
    %1362 = vmatprep.subr.mxu0 %v1361
    %v1363 = vand.u32 %v102, 4294901760
    %1364 = vmatpush1.msra.mxu0 %v1363
    %v1365 = vand.u32 %v105, 4294901760
    %1366 = vmatprep.subr.mxu0 %v1365
    %v1367 = vand.u32 %v104, 4294901760
    %1368 = vmatpush1.msra.mxu0 %v1367
    %v1369 = vand.u32 %v107, 4294901760
    %1370 = vmatprep.subr.mxu0 %v1369
    %v1371 = vand.u32 %v106, 4294901760
    %1372 = vmatpush1.msra.mxu0 %v1371
    %v1373 = vand.u32 %v109, 4294901760
    %1374 = vmatprep.subr.mxu0 %v1373
    %v1375 = vand.u32 %v108, 4294901760
    %1376 = vmatpush1.msra.mxu0 %v1375
    %v1377 = vand.u32 %v111, 4294901760
    %1378 = vmatprep.subr.mxu0 %v1377
    %v1379 = vand.u32 %v110, 4294901760
    %1380 = vmatpush1.msra.mxu0 %v1379
    %v1381 = vand.u32 %v113, 4294901760
    %1382 = vmatprep.subr.mxu0 %v1381
    %v1383 = vand.u32 %v112, 4294901760
    %1384 = vmatpush1.msra.mxu0 %v1383
    %v1385 = vand.u32 %v115, 4294901760
    %1386 = vmatprep.subr.mxu0 %v1385
    %v1387 = vand.u32 %v114, 4294901760
    %1388 = vmatpush1.msra.mxu0 %v1387
    %v1389 = vand.u32 %v117, 4294901760
    %1390 = vmatprep.subr.mxu0 %v1389
    %v1391 = vand.u32 %v116, 4294901760
    %1392 = vmatpush1.msra.mxu0 %v1391
    %v1393 = vand.u32 %v53, 4294901760
    %1394 = vmatprep.mubr.f32.mxu0 %v1393
    %v1395 = vand.u32 %v52, 4294901760
    %1396 = vmatmul.mubr.f32.gmra.mrb[0].mxu0 %v1395
    %v1397 = vpop.f32.mrb[0].mxu0
    %v1398 = vadd.f32 %v1261, %v1397
    %v1399 = vpop.f32.mrb[0].mxu0
    %v1400 = vadd.f32 %v1263, %v1399
    %1401 = vdwg.mxu0
    %s1402 = sld [smem:[#allocation2]]
    %v1403 = vstv %s1402
    %v1404 = vmul.f32 %v1403, %v1398
    %s1405 = sld [smem:[#allocation2 + $0xa]]
    %v1406 = vstv %s1405
    %v1407 = vmul.f32 %v1406, %v1400
    %v1408 = vadd.f32 %v1404, %v1407
    %s1409 = sld [smem:[#allocation2 + $0x14]]
    %v1410 = vstv %s1409
    %v1411 = vadd.f32 %v1408, %v1410
    %s1412 = sld [smem:[#allocation2 + $0x1e]]
    %v1413 = vtanh.pop %v1411
    %v1414 = vstv %s1412
    %v1415 = vmul.f32 %v1414, %v1413
    %v1416 = vadd.f32 %v1415, 0.0
    %s1417 = sld [smem:[#allocation2 + $0x1]]
    %v1418 = vstv %s1417
    %v1419 = vmul.f32 %v1418, %v1398
    %s1420 = sld [smem:[#allocation2 + $0xb]]
    %v1421 = vstv %s1420
    %v1422 = vmul.f32 %v1421, %v1400
    %v1423 = vadd.f32 %v1419, %v1422
    %s1424 = sld [smem:[#allocation2 + $0x15]]
    %v1425 = vstv %s1424
    %v1426 = vadd.f32 %v1423, %v1425
    %s1427 = sld [smem:[#allocation2 + $0x1f]]
    %v1428 = vtanh.pop %v1426
    %v1429 = vstv %s1427
    %v1430 = vmul.f32 %v1429, %v1428
    %v1431 = vadd.f32 %v1416, %v1430
    %s1432 = sld [smem:[#allocation2 + $0x2]]
    %v1433 = vstv %s1432
    %v1434 = vmul.f32 %v1433, %v1398
    %s1435 = sld [smem:[#allocation2 + $0xc]]
    %v1436 = vstv %s1435
    %v1437 = vmul.f32 %v1436, %v1400
    %v1438 = vadd.f32 %v1434, %v1437
    %s1439 = sld [smem:[#allocation2 + $0x16]]
    %v1440 = vstv %s1439
    %v1441 = vadd.f32 %v1438, %v1440
    %s1442 = sld [smem:[#allocation2 + $0x20]]
    %v1443 = vtanh.pop %v1441
    %v1444 = vstv %s1442
    %v1445 = vmul.f32 %v1444, %v1443
    %v1446 = vadd.f32 %v1431, %v1445
    %s1447 = sld [smem:[#allocation2 + $0x3]]
    %v1448 = vstv %s1447
    %v1449 = vmul.f32 %v1448, %v1398
    %s1450 = sld [smem:[#allocation2 + $0xd]]
    %v1451 = vstv %s1450
    %v1452 = vmul.f32 %v1451, %v1400
    %v1453 = vadd.f32 %v1449, %v1452
    %s1454 = sld [smem:[#allocation2 + $0x17]]
    %v1455 = vstv %s1454
    %v1456 = vadd.f32 %v1453, %v1455
    %s1457 = sld [smem:[#allocation2 + $0x21]]
    %v1458 = vtanh.pop %v1456
    %v1459 = vstv %s1457
    %v1460 = vmul.f32 %v1459, %v1458
    %v1461 = vadd.f32 %v1446, %v1460
    %s1462 = sld [smem:[#allocation2 + $0x4]]
    %v1463 = vstv %s1462
    %v1464 = vmul.f32 %v1463, %v1398
    %s1465 = sld [smem:[#allocation2 + $0xe]]
    %v1466 = vstv %s1465
    %v1467 = vmul.f32 %v1466, %v1400
    %v1468 = vadd.f32 %v1464, %v1467
    %s1469 = sld [smem:[#allocation2 + $0x18]]
    %v1470 = vstv %s1469
    %v1471 = vadd.f32 %v1468, %v1470
    %s1472 = sld [smem:[#allocation2 + $0x22]]
    %v1473 = vtanh.pop %v1471
    %v1474 = vstv %s1472
    %v1475 = vmul.f32 %v1474, %v1473
    %v1476 = vadd.f32 %v1461, %v1475
    %s1477 = sld [smem:[#allocation2 + $0x5]]
    %v1478 = vstv %s1477
    %v1479 = vmul.f32 %v1478, %v1398
    %s1480 = sld [smem:[#allocation2 + $0xf]]
    %v1481 = vstv %s1480
    %v1482 = vmul.f32 %v1481, %v1400
    %v1483 = vadd.f32 %v1479, %v1482
    %s1484 = sld [smem:[#allocation2 + $0x19]]
    %v1485 = vstv %s1484
    %v1486 = vadd.f32 %v1483, %v1485
    %s1487 = sld [smem:[#allocation2 + $0x23]]
    %v1488 = vtanh.pop %v1486
    %v1489 = vstv %s1487
    %v1490 = vmul.f32 %v1489, %v1488
    %v1491 = vadd.f32 %v1476, %v1490
    %s1492 = sld [smem:[#allocation2 + $0x6]]
    %v1493 = vstv %s1492
    %v1494 = vmul.f32 %v1493, %v1398
    %s1495 = sld [smem:[#allocation2 + $0x10]]
    %v1496 = vstv %s1495
    %v1497 = vmul.f32 %v1496, %v1400
    %v1498 = vadd.f32 %v1494, %v1497
    %s1499 = sld [smem:[#allocation2 + $0x1a]]
    %v1500 = vstv %s1499
    %v1501 = vadd.f32 %v1498, %v1500
    %s1502 = sld [smem:[#allocation2 + $0x24]]
    %v1503 = vtanh.pop %v1501
    %v1504 = vstv %s1502
    %v1505 = vmul.f32 %v1504, %v1503
    %v1506 = vadd.f32 %v1491, %v1505
    %s1507 = sld [smem:[#allocation2 + $0x7]]
    %v1508 = vstv %s1507
    %v1509 = vmul.f32 %v1508, %v1398
    %s1510 = sld [smem:[#allocation2 + $0x11]]
    %v1511 = vstv %s1510
    %v1512 = vmul.f32 %v1511, %v1400
    %v1513 = vadd.f32 %v1509, %v1512
    %s1514 = sld [smem:[#allocation2 + $0x1b]]
    %v1515 = vstv %s1514
    %v1516 = vadd.f32 %v1513, %v1515
    %s1517 = sld [smem:[#allocation2 + $0x25]]
    %v1518 = vtanh.pop %v1516
    %v1519 = vstv %s1517
    %v1520 = vmul.f32 %v1519, %v1518
    %v1521 = vadd.f32 %v1506, %v1520
    %s1522 = sld [smem:[#allocation2 + $0x8]]
    %v1523 = vstv %s1522
    %v1524 = vmul.f32 %v1523, %v1398
    %s1525 = sld [smem:[#allocation2 + $0x12]]
    %v1526 = vstv %s1525
    %v1527 = vmul.f32 %v1526, %v1400
    %v1528 = vadd.f32 %v1524, %v1527
    %s1529 = sld [smem:[#allocation2 + $0x1c]]
    %v1530 = vstv %s1529
    %v1531 = vadd.f32 %v1528, %v1530
    %s1532 = sld [smem:[#allocation2 + $0x26]]
    %v1533 = vtanh.pop %v1531
    %v1534 = vstv %s1532
    %v1535 = vmul.f32 %v1534, %v1533
    %v1536 = vadd.f32 %v1521, %v1535
    %s1537 = sld [smem:[#allocation2 + $0x9]]
    %v1538 = vstv %s1537
    %v1539 = vmul.f32 %v1538, %v1398
    %s1540 = sld [smem:[#allocation2 + $0x13]]
    %v1541 = vstv %s1540
    %v1542 = vmul.f32 %v1541, %v1400
    %v1543 = vadd.f32 %v1539, %v1542
    %s1544 = sld [smem:[#allocation2 + $0x1d]]
    %v1545 = vstv %s1544
    %v1546 = vadd.f32 %v1543, %v1545
    %s1547 = sld [smem:[#allocation2 + $0x27]]
    %v1548 = vtanh.pop %v1546
    %v1549 = vstv %s1547
    %v1550 = vmul.f32 %v1549, %v1548
    %v1551 = vadd.f32 %v1536, %v1550
    %s1552 = sld [smem:[#allocation2 + $0x28]]
    %v1553 = vstv %s1552
    %v1554 = vadd.f32 %v1551, %v1553
    %1555 = vst [vmem:[#allocation9] sm:$0xff] %v1554
    // Predicated region
    $region26: #{tpu_custom_call.1} parent=1 // pred_check
      _
    $region27: #{tpu_custom_call.1} parent=1 // pred_check_branch
      %1557 = sbr.rel (0) target = $region29
    $region28: #{tpu_custom_call.1} parent=1 // pred_region
      %s1559 = ssub.s32 128, 128
      %1560 = vsyncadd [#allocation4], %s1559
      %s1562 = sshll.u32 [#allocation9], 4
      %s1563 = int_to_ptr.vmem [resolvable:$true] %s1562
      %1565 = dma.vmem_to_hbm [thread:$0]  %s1563, 128, %s3, [#allocation4]
    $region29: #{tpu_custom_call.1} parent=1 // pred_fallthru
      _
    // Predicated region
    $region30: #{tpu_custom_call.1} parent=1 // pred_check
      _
    $region31: #{tpu_custom_call.1} parent=1 // pred_check_branch
      %1567 = sbr.rel (0) target = $region33
    $region32: #{tpu_custom_call.1} parent=1 // pred_region
      %1568 = dma.done [#allocation4], 128
    $region33: #{tpu_custom_call.1} parent=1 // pred_fallthru
      _
    %1569 = vsyncpa [#allocation3], 1
    %1570 = vsyncpa [#allocation8], 1
    %1571 = vsyncpa [#allocation4], 1
    %1572 = vsyncpa [#allocation5], 1

</llo_original>
